<compile_context>
chip_gen: v6e
topology: v6e:2x2x1
jax: 0.10.0
libtpu: 0.0.40
codegen_flags: <defaults>
</compile_context>

<pallas_src>
import numpy as np
import jax
import jax.numpy as jnp
from jax.experimental import pallas as pl
from jax.experimental.pallas import tpu as pltpu

# ---------------- sizes (small stand-ins for CLIP's 224/512/...) ----------------
B        = 8            # batch (full sublane; at real sizes use 128/256 for MXU occupancy)
C        = 3            # channels (RGB)
H = W    = 16           # spatial (stand-in for image_size=224)
PAD      = 2            # visual prompt padding (stand-in for prompt_size=30)
D        = 64           # joint embedding dim (image/text feature dim)
N_CLS    = 8            # number of classes / prompts
N_CLS_P  = 128          # lane-padded class count (output last dim = multiple of 128)
N_TKN    = 8            # tokens per prompt
CTX      = 32           # prompt context / token embedding dim
P_FLAT   = C * H * W    # 768
TK       = 256          # K tile over P_FLAT (multiple of 128) -> 3 grid steps
EPS      = 1e-12        # guards rsqrt against an all-zero feature row


# ---------------- fused Pallas kernel: K-tiled encoder + folded prompts + logits ----------------
def _fused_clip_kernel(scale_ref, x_ref, w_img_ref, t0_ref, wp_ref, out_ref, acc_ref):
    k = pl.program_id(0)

    @pl.when(k == 0)
    def _():
        acc_ref[...] = jnp.zeros_like(acc_ref)

    # ---- image encoder partial product for this K slice (bf16 MXU, f32 accumulate)
    acc_ref[...] += jnp.dot(x_ref[...], w_img_ref[...],
                            preferred_element_type=jnp.float32)          # (B, D)

    # ---- epilogue only on the last K step
    @pl.when(k == pl.num_programs(0) - 1)
    def _():
        feats = acc_ref[...]                                             # (B, D) f32
        imf = feats * jax.lax.rsqrt(
            jnp.sum(feats * feats, axis=-1, keepdims=True) + EPS)        # L2 normalize

        # prompt_learner + text_encoder (algebraically folded, see header):
        #   tf[b, c] = T0[c] + imf[b] @ W'
        # Second matmul also in bf16 (f32 accumulation).
        u = jnp.dot(imf.astype(jnp.bfloat16), wp_ref[...],
                    preferred_element_type=jnp.float32)                  # (B, D)
        tf = t0_ref[...].astype(jnp.float32)[None, :, :] + u[:, None, :] # (B, N_CLS_P, D)
        tf = tf * jax.lax.rsqrt(jnp.sum(tf * tf, axis=-1, keepdims=True) + EPS)

        # l[b, c] = exp(logit_scale) * <imf[b], tf[b, c]>  (lane-dim contraction, no transpose)
        # TODO(synk): at real N_CLS (~1000) tile this epilogue over class blocks of 128-256
        # so the (B, N_CLS, D) f32 tf never fully materializes.
        logits = jnp.sum(imf[:, None, :] * tf, axis=-1)                  # (B, N_CLS_P)
        out_ref[...] = scale_ref[0] * logits


def fused_clip_logits(scale, x_flat_bf16, w_img_bf16, t0_pad_bf16, w_prime_bf16):
    n_k = P_FLAT // TK
    return pl.pallas_call(
        _fused_clip_kernel,
        out_shape=jax.ShapeDtypeStruct((B, N_CLS_P), jnp.float32),
        grid=(n_k,),
        in_specs=[
            # exp(logit_scale): scalar in SMEM (no VMEM block / DMA)
            pl.BlockSpec(memory_space=pltpu.MemorySpace.SMEM),
            pl.BlockSpec((B, TK), lambda k: (0, k)),        # flattened image slice (bf16)
            pl.BlockSpec((TK, D), lambda k: (k, 0)),        # streamed image-encoder weight (bf16)
            pl.BlockSpec((N_CLS_P, D), lambda k: (0, 0)),   # T0 (class-padded, bf16)
            pl.BlockSpec((D, D), lambda k: (0, 0)),         # W' = w_meta @ w_txt (bf16)
        ],
        out_specs=pl.BlockSpec((B, N_CLS_P), lambda k: (0, 0)),
        scratch_shapes=[pltpu.VMEM((B, D), jnp.float32)],   # feats accumulator
        compiler_params=pltpu.CompilerParams(
            dimension_semantics=("arbitrary",)),            # K is a reduction axis
    )(scale, x_flat_bf16, w_img_bf16, t0_pad_bf16, w_prime_bf16)


# ---------------- visual "padding" prompter (plain-JAX glue) ----------------
def padding_prompter(image, pads):
    # prompters.padding: learnable border, interior zeros, added elementwise.
    pad_up, pad_down, pad_left, pad_right = pads
    base = jnp.zeros((1, C, H - 2 * PAD, W - 2 * PAD), jnp.float32)
    mid = jnp.concatenate([pad_left, base, pad_right], axis=3)
    prompt = jnp.concatenate([pad_up, mid, pad_down], axis=2)
    return image + prompt


# ---------------- parameter-only preprocessing (done ONCE, not per forward) ----------------
def prepare_inference_params(params):
    t0 = jnp.dot(params["base_prompts"].mean(axis=1), params["w_txt"])   # (N_CLS, D)
    t0_pad = jnp.zeros((N_CLS_P, D), jnp.float32).at[:N_CLS].set(t0)     # lane-padded classes
    return {
        "scale": params["scale"],                                        # already exp(logit_scale)
        "w_img_bf16": params["w_img"].astype(jnp.bfloat16),
        "t0_pad_bf16": t0_pad.astype(jnp.bfloat16),
        "w_prime_bf16": jnp.dot(params["w_meta"], params["w_txt"]).astype(jnp.bfloat16),
        "pads": params["pads"],
    }


# ---------------- CustomCLIP.forward ----------------
def custom_clip_forward(image, prep):
    # NOTE: the reference computes `images = self.prompter(image)` but then encodes the
    # *unprompted* image; we reproduce that behavior exactly (prompter output unused).
    _images = padding_prompter(image, prep["pads"])

    x_flat = image.reshape(B, -1).astype(jnp.bfloat16)   # small per-call cast (activations only)
    logits_pad = fused_clip_logits(prep["scale"], x_flat, prep["w_img_bf16"],
                                   prep["t0_pad_bf16"], prep["w_prime_bf16"])  # (B, N_CLS_P)
    return logits_pad[:, :N_CLS]                         # drop lane padding


# ---------------- pure-JAX reference (unfolded math) for correctness ----------------
def reference_forward(image, params):
    # Same bf16 rounding of the image-encoder inputs as the kernel; everything else f32
    # and written with the *unfolded* per-sample prompt_learner / text_encoder math.
    x = image.reshape(B, -1).astype(jnp.bfloat16).astype(jnp.float32)
    w = params["w_img"].astype(jnp.bfloat16).astype(jnp.float32)
    feats = x @ w
    imf = feats / jnp.linalg.norm(feats, axis=-1, keepdims=True)
    bias = imf @ params["w_meta"]                                     # (B, CTX)
    prompts = params["base_prompts"][None] + bias[:, None, None, :]   # (B, N_CLS, N_TKN, CTX)
    tmean = prompts.mean(axis=2)
    tf = jnp.einsum("bcx,xd->bcd", tmean, params["w_txt"])
    tf = tf / jnp.linalg.norm(tf, axis=-1, keepdims=True)
    return params["scale"][0] * jnp.einsum("bd,bcd->bc", imf, tf)


def init_params(key):
    ks = jax.random.split(key, 8)
    params = {
        "w_img": jax.random.normal(ks[0], (P_FLAT, D), jnp.float32) / np.sqrt(P_FLAT),
        "w_meta": jax.random.normal(ks[1], (D, CTX), jnp.float32) / np.sqrt(D),
        "w_txt": jax.random.normal(ks[2], (CTX, D), jnp.float32) / np.sqrt(CTX),
        "base_prompts": 0.02 * jax.random.normal(ks[3], (N_CLS, N_TKN, CTX), jnp.float32),
        # logit_scale is stored already exponentiated: exp(log(1/0.07)) = 1/0.07.
        "scale": jnp.full((1,), np.exp(np.log(1.0 / 0.07)), jnp.float32),
        "pads": (
            0.1 * jax.random.normal(ks[4], (1, C, PAD, W), jnp.float32),
            0.1 * jax.random.normal(ks[5], (1, C, PAD, W), jnp.float32),
            0.1 * jax.random.normal(ks[6], (1, C, H - 2 * PAD, PAD), jnp.float32),
            0.1 * jax.random.normal(ks[7], (1, C, H - 2 * PAD, PAD), jnp.float32),
        ),
    }
    return params


if __name__ == "__main__":
    key = jax.random.PRNGKey(0)
    k_img, k_par = jax.random.split(key)
    image = jax.random.normal(k_img, (B, C, H, W), jnp.float32)   # NCHW like PyTorch
    params = init_params(k_par)
    prep = prepare_inference_params(params)                        # one-time bf16 cast + fold

    logits = custom_clip_forward(image, prep)
    logits = jax.block_until_ready(logits)

    ref = reference_forward(image, params)
    # Tolerance covers the bf16 MXU paths (both matmuls) + the exact algebraic fold vs
    # the unfolded f32 reference; logits have magnitude O(10) from exp(logit_scale).
    np.testing.assert_allclose(np.asarray(logits), np.asarray(ref), rtol=2e-2, atol=1e-1)
    assert logits.shape == (B, N_CLS)

    print("KERNEL_OK")
</pallas_src>

<mosaic_0001>
module attributes {stable_mosaic.version = 11 : i64} {
  func.func @_fused_clip_kernel(%arg0: i32, %arg1: memref<1xf32, #tpu.memory_space<smem>>, %arg2: memref<8x256xbf16, #tpu.memory_space<vmem>>, %arg3: memref<256x64xbf16, #tpu.memory_space<vmem>>, %arg4: memref<128x64xbf16, #tpu.memory_space<vmem>>, %arg5: memref<64x64xbf16, #tpu.memory_space<vmem>>, %arg6: memref<8x128xf32, #tpu.memory_space<vmem>>, %arg7: memref<8x64xf32, #tpu.memory_space<vmem>>) attributes {dimension_semantics = [#tpu.dimension_semantics<arbitrary>], iteration_bounds = array<i64: 3>, scalar_prefetch = 0 : i64, scratch_operands = 1 : i64, tpu.core_type = #tpu.core_type<tc>, window_params = [{transform_indices = @transform_0, window_bounds = array<i64: 1>}, {transform_indices = @transform_1, window_bounds = array<i64: 8, 256>}, {transform_indices = @transform_2, window_bounds = array<i64: 256, 64>}, {pipeline_mode = #tpu.pipeline_mode<synchronous>, transform_indices = @transform_3, window_bounds = array<i64: 128, 64>}, {pipeline_mode = #tpu.pipeline_mode<synchronous>, transform_indices = @transform_4, window_bounds = array<i64: 64, 64>}, {pipeline_mode = #tpu.pipeline_mode<synchronous>, transform_indices = @transform_5, window_bounds = array<i64: 8, 128>}]} {
    %c0_i32 = arith.constant 0 : i32
    %0 = arith.cmpi eq, %arg0, %c0_i32 : i32
    %1 = arith.extui %0 : i1 to i32
    %c0_i32_0 = arith.constant 0 : i32
    %2 = arith.cmpi ne, %1, %c0_i32_0 : i32
    scf.if %2 {
      %cst_9 = arith.constant 0.000000e+00 : f32
      %12 = vector.broadcast %cst_9 : f32 to vector<8x64xf32>
      %c0_10 = arith.constant 0 : index
      %c0_11 = arith.constant 0 : index
      %13 = vector.load %arg7[%c0_10, %c0_11] : memref<8x64xf32, #tpu.memory_space<vmem>>, vector<8x64xf32>
      tpu.vector_store %arg7[%c0_10, %c0_11], %12 {strides = array<i32>} : memref<8x64xf32, #tpu.memory_space<vmem>>, vector<8x64xf32>,
    } else {
    }
    %c0 = arith.constant 0 : index
    %c0_1 = arith.constant 0 : index
    %3 = vector.load %arg7[%c0, %c0_1] : memref<8x64xf32, #tpu.memory_space<vmem>>, vector<8x64xf32>
    %c0_2 = arith.constant 0 : index
    %c0_3 = arith.constant 0 : index
    %4 = vector.load %arg2[%c0_2, %c0_3] : memref<8x256xbf16, #tpu.memory_space<vmem>>, vector<8x256xbf16>
    %c0_4 = arith.constant 0 : index
    %c0_5 = arith.constant 0 : index
    %5 = vector.load %arg3[%c0_4, %c0_5] : memref<256x64xbf16, #tpu.memory_space<vmem>>, vector<256x64xbf16>
    %cst = arith.constant dense<0.000000e+00> : vector<8x64xf32>
    %6 = tpu.matmul %4, %5, %cst {dimension_numbers = #tpu.dot_dimension_numbers<[1], [0], [0], [1], [0, 0, 1, 1], [], []>} : vector<8x256xbf16>, vector<256x64xbf16>, vector<8x64xf32> -> vector<8x64xf32>
    %7 = arith.addf %3, %6 : vector<8x64xf32>
    %c0_6 = arith.constant 0 : index
    %c0_7 = arith.constant 0 : index
    %8 = vector.load %arg7[%c0_6, %c0_7] : memref<8x64xf32, #tpu.memory_space<vmem>>, vector<8x64xf32>
    tpu.vector_store %arg7[%c0_6, %c0_7], %7 {strides = array<i32>} : memref<8x64xf32, #tpu.memory_space<vmem>>, vector<8x64xf32>,
    %c2_i32 = arith.constant 2 : i32
    %9 = arith.cmpi eq, %arg0, %c2_i32 : i32
    %10 = arith.extui %9 : i1 to i32
    %c0_i32_8 = arith.constant 0 : i32
    %11 = arith.cmpi ne, %10, %c0_i32_8 : i32
    scf.if %11 {
      %c0_9 = arith.constant 0 : index
      %c0_10 = arith.constant 0 : index
      %12 = vector.load %arg7[%c0_9, %c0_10] : memref<8x64xf32, #tpu.memory_space<vmem>>, vector<8x64xf32>
      %13 = arith.mulf %12, %12 : vector<8x64xf32>
      %cst_11 = arith.constant dense<0.000000e+00> : vector<8xf32>
      %14 = vector.multi_reduction <add>, %13, %cst_11 [1] : vector<8x64xf32> to vector<8xf32>
      %15 = vector.shape_cast %14 : vector<8xf32> to vector<8x1xf32>
      %cst_12 = arith.constant 9.99999996E-13 : f32
      %16 = vector.broadcast %cst_12 : f32 to vector<8x1xf32>
      %17 = arith.addf %15, %16 : vector<8x1xf32>
      %18 = math.rsqrt %17 : vector<8x1xf32>
      %19 = vector.broadcast %18 : vector<8x1xf32> to vector<8x64xf32>
      %20 = arith.mulf %12, %19 : vector<8x64xf32>
      %21 = arith.truncf %20 : vector<8x64xf32> to vector<8x64xbf16>
      %c0_13 = arith.constant 0 : index
      %c0_14 = arith.constant 0 : index
      %22 = vector.load %arg5[%c0_13, %c0_14] : memref<64x64xbf16, #tpu.memory_space<vmem>>, vector<64x64xbf16>
      %cst_15 = arith.constant dense<0.000000e+00> : vector<8x64xf32>
      %23 = tpu.matmul %21, %22, %cst_15 {dimension_numbers = #tpu.dot_dimension_numbers<[1], [0], [0], [1], [0, 0, 1, 1], [], []>} : vector<8x64xbf16>, vector<64x64xbf16>, vector<8x64xf32> -> vector<8x64xf32>
      %c0_16 = arith.constant 0 : index
      %c0_17 = arith.constant 0 : index
      %24 = vector.load %arg4[%c0_16, %c0_17] : memref<128x64xbf16, #tpu.memory_space<vmem>>, vector<128x64xbf16>
      %25 = arith.extf %24 : vector<128x64xbf16> to vector<128x64xf32>
      %26 = vector.shape_cast %25 : vector<128x64xf32> to vector<1x128x64xf32>
      %27 = vector.shape_cast %23 : vector<8x64xf32> to vector<8x1x64xf32>
      %28 = vector.broadcast %26 : vector<1x128x64xf32> to vector<8x128x64xf32>
      %29 = vector.broadcast %27 : vector<8x1x64xf32> to vector<8x128x64xf32>
      %30 = arith.addf %28, %29 : vector<8x128x64xf32>
      %31 = arith.mulf %30, %30 : vector<8x128x64xf32>
      %cst_18 = arith.constant dense<0.000000e+00> : vector<8x128xf32>
      %32 = vector.multi_reduction <add>, %31, %cst_18 [2] : vector<8x128x64xf32> to vector<8x128xf32>
      %33 = vector.shape_cast %32 : vector<8x128xf32> to vector<8x128x1xf32>
      %cst_19 = arith.constant 9.99999996E-13 : f32
      %34 = vector.broadcast %cst_19 : f32 to vector<8x128x1xf32>
      %35 = arith.addf %33, %34 : vector<8x128x1xf32>
      %36 = math.rsqrt %35 : vector<8x128x1xf32>
      %37 = vector.broadcast %36 : vector<8x128x1xf32> to vector<8x128x64xf32>
      %38 = arith.mulf %30, %37 : vector<8x128x64xf32>
      %39 = vector.shape_cast %20 : vector<8x64xf32> to vector<8x1x64xf32>
      %40 = vector.broadcast %39 : vector<8x1x64xf32> to vector<8x128x64xf32>
      %41 = arith.mulf %40, %38 : vector<8x128x64xf32>
      %cst_20 = arith.constant dense<0.000000e+00> : vector<8x128xf32>
      %42 = vector.multi_reduction <add>, %41, %cst_20 [2] : vector<8x128x64xf32> to vector<8x128xf32>
      %c0_21 = arith.constant 0 : index
      %43 = memref.load %arg1[%c0_21] : memref<1xf32, #tpu.memory_space<smem>>
      %44 = vector.broadcast %43 : f32 to vector<8x128xf32>
      %45 = arith.mulf %44, %42 : vector<8x128xf32>
      %c0_22 = arith.constant 0 : index
      %c0_23 = arith.constant 0 : index
      %46 = vector.load %arg6[%c0_22, %c0_23] : memref<8x128xf32, #tpu.memory_space<vmem>>, vector<8x128xf32>
      tpu.vector_store %arg6[%c0_22, %c0_23], %45 {strides = array<i32>} : memref<8x128xf32, #tpu.memory_space<vmem>>, vector<8x128xf32>,
    } else {
    }
    return
  }
  func.func @transform_0(%arg0: i32) -> i32 {
    %c0_i32 = arith.constant 0 : i32
    %c0_i32_0 = arith.constant 0 : i32
    return %c0_i32 : i32
  }
  func.func @transform_1(%arg0: i32) -> (i32, i32) {
    %c0_i32 = arith.constant 0 : i32
    %c0_i32_0 = arith.constant 0 : i32
    return %c0_i32, %arg0 : i32, i32
  }
  func.func @transform_2(%arg0: i32) -> (i32, i32) {
    %c0_i32 = arith.constant 0 : i32
    %c0_i32_0 = arith.constant 0 : i32
    return %arg0, %c0_i32 : i32, i32
  }
  func.func @transform_3(%arg0: i32) -> (i32, i32) {
    %c0_i32 = arith.constant 0 : i32
    %c0_i32_0 = arith.constant 0 : i32
    %c0_i32_1 = arith.constant 0 : i32
    return %c0_i32, %c0_i32_0 : i32, i32
  }
  func.func @transform_4(%arg0: i32) -> (i32, i32) {
    %c0_i32 = arith.constant 0 : i32
    %c0_i32_0 = arith.constant 0 : i32
    %c0_i32_1 = arith.constant 0 : i32
    return %c0_i32, %c0_i32_0 : i32, i32
  }
  func.func @transform_5(%arg0: i32) -> (i32, i32) {
    %c0_i32 = arith.constant 0 : i32
    %c0_i32_0 = arith.constant 0 : i32
    %c0_i32_1 = arith.constant 0 : i32
    return %c0_i32, %c0_i32_0 : i32, i32
  }
}

</mosaic_0001>

<llo_original>
// kernel: tpu_custom_call.1
$region0: #{tpu_custom_call.1}
  #allocation0 [shape = 'u32[]', space=smem, size = 0x4, offset = 0x4, fixed_abs, tag = 'smem constant byte address 0x4 - core index']
  #allocation1 [shape = 'u32[144,128]{1,0:T(1,128)}', space=vmem, size = 0x12000, scoped, tag = 'internal scratch']
  #allocation2 [shape = 'f32[8,64]{1,0:T(8,128)}', space=vmem, size = 0x1000, scoped, tag = 'scratch operand']
  #allocation3 [shape = 'f32[1]{0:T(128)S(6)}', space=smem, size = 0x200, scoped, tag = 'scoped memory for tpu_custom_call.1']
  %s0 = inlined_call_operand.<no memory space> [shape: f32[1], index: 0, kind: input, shape index: {}]
  %s1 = inlined_call_operand.vmem [shape: bf16[8,768], index: 1, kind: input, shape index: {}]
  %s2 = inlined_call_operand.vmem [shape: bf16[768,64], index: 2, kind: input, shape index: {}]
  %s3 = inlined_call_operand.vmem [shape: bf16[128,64], index: 3, kind: input, shape index: {}]
  %s4 = inlined_call_operand.vmem [shape: bf16[64,64], index: 4, kind: input, shape index: {}]
  %s5 = inlined_call_operand.hbm [shape: f32[8,128], index: 5, kind: output, shape index: {}]
  %s6 = sld [smem:[#allocation0]]
  $region61: #{tpu_custom_call.1} parent=0
    _
  %s8 = ssub.s32 1, %s6
  %s9 = scalar_select 0, %s8, %s6
  %10 = sst [smem:[#allocation3]] %s0
  $region1: #{tpu_custom_call.1} parent=0
    #allocation4 [shape = 'u8[4096]{0}', space=vmem, size = 0x1000, scoped, tag = 'output window, operand 0, single buffered']
    #allocation5 [shape = 's32[2]{0}', space=sflag, size = 0x8, scoped, tag = 'scoped memory for tpu_custom_call.1']
    %11 = vsyncpa [#allocation5], 0
    loop: start=0, step=1, limit=5
    $region2: #{tpu_custom_call.1} parent=1 // loop_pre_header
      _
    $region3: #{tpu_custom_call.1} parent=1 // loop_header
      %s13 = sphi 0, %s17
      %p14 = scmp.ge.s32.totalorder %s13, 5
      %s21 = sphi 0, %s21
      %s23 = sphi 0, %s21
      %s24 = sphi 0, %s23
      %s38 = sphi 0, %s24
      %s44 = sphi 0, %s46
      %s47 = sphi 0, %s44
      %s48 = sphi 0, %s47
      %s64 = sphi 0, %s48
      %s70 = sphi 0, %s72
      %s73 = sphi 0, %s70
      %s74 = sphi 0, %s73
      %s90 = sphi 0, %s74
      %s94 = sphi 0, %s94
      %s96 = sphi 0, %s94
      %s97 = sphi 0, %s96
      %s111 = sphi 0, %s97
      %s115 = sphi 0, %s115
      %s117 = sphi 0, %s115
      %s118 = sphi 0, %s117
      %s132 = sphi 0, %s118
      %s136 = sphi 0, %s136
      %s138 = sphi 0, %s136
      %s139 = sphi 0, %s138
      %s153 = sphi 0, %s139
    $region4: #{tpu_custom_call.1} parent=1 // loop_header_branch
      %16 = sbr.rel (%p14) target = $region8
    $region5: #{tpu_custom_call.1} parent=1 // loop_body
      %s18 = ssub.s32 %s13, 1
      %s19 = ssub.s32 %s13, 2
      %s20 = sadd.s32 %s13, 1
      %s22 = sadd.s32 %s21, 1
      %p25 = scmp.eq.s32.totalorder %s13, 2
      %p26 = scmp.ne.s32.totalorder %s21, %s23
      %p27 = scmp.eq.s32.totalorder %s13, 0
      %p28 = por %p26, %p27
      %p29 = scmp.ne.s32.totalorder %s21, %s23
      %p30 = scmp.eq.s32.totalorder %s18, 2
      %p31 = por %p29, %p30
      %p32 = scmp.ne.s32.totalorder %s23, %s24
      %p33 = scmp.eq.s32.totalorder %s18, 0
      %p34 = por %p32, %p33
      %p35 = scmp.ne.s32.totalorder %s23, %s24
      %p36 = scmp.eq.s32.totalorder %s19, 2
      %p37 = por %p35, %p36
      %p39 = scmp.ne.s32.totalorder %s24, %s38
      %p40 = scmp.eq.s32.totalorder %s19, 0
      %p41 = por %p39, %p40
      %s42 = ssub.s32 %s13, %s20
      %p43 = scmp.eq.s32.totalorder %s42, 0
      %s45 = sadd.s32 %s44, 1
      %s46 = scalar_select %p43, %s44, %s45
      %p49 = pneg %p43
      %p50 = scmp.eq.s32.totalorder %s13, 2
      %p51 = por %p49, %p50
      %p52 = scmp.ne.s32.totalorder %s44, %s47
      %p53 = scmp.eq.s32.totalorder %s13, 0
      %p54 = por %p52, %p53
      %p55 = scmp.ne.s32.totalorder %s44, %s47
      %p56 = scmp.eq.s32.totalorder %s18, 2
      %p57 = por %p55, %p56
      %p58 = scmp.ne.s32.totalorder %s47, %s48
      %p59 = scmp.eq.s32.totalorder %s18, 0
      %p60 = por %p58, %p59
      %p61 = scmp.ne.s32.totalorder %s47, %s48
      %p62 = scmp.eq.s32.totalorder %s19, 2
      %p63 = por %p61, %p62
      %p65 = scmp.ne.s32.totalorder %s48, %s64
      %p66 = scmp.eq.s32.totalorder %s19, 0
      %p67 = por %p65, %p66
      %s68 = ssub.s32 %s13, %s20
      %p69 = scmp.eq.s32.totalorder %s68, 0
      %s71 = sadd.s32 %s70, 1
      %s72 = scalar_select %p69, %s70, %s71
      %p75 = pneg %p69
      %p76 = scmp.eq.s32.totalorder %s13, 2
      %p77 = por %p75, %p76
      %p78 = scmp.ne.s32.totalorder %s70, %s73
      %p79 = scmp.eq.s32.totalorder %s13, 0
      %p80 = por %p78, %p79
      %p81 = scmp.ne.s32.totalorder %s70, %s73
      %p82 = scmp.eq.s32.totalorder %s18, 2
      %p83 = por %p81, %p82
      %p84 = scmp.ne.s32.totalorder %s73, %s74
      %p85 = scmp.eq.s32.totalorder %s18, 0
      %p86 = por %p84, %p85
      %p87 = scmp.ne.s32.totalorder %s73, %s74
      %p88 = scmp.eq.s32.totalorder %s19, 2
      %p89 = por %p87, %p88
      %p91 = scmp.ne.s32.totalorder %s74, %s90
      %p92 = scmp.eq.s32.totalorder %s19, 0
      %p93 = por %p91, %p92
      %s95 = sadd.s32 %s94, 1
      %p98 = scmp.eq.s32.totalorder %s13, 2
      %p99 = scmp.ne.s32.totalorder %s94, %s96
      %p100 = scmp.eq.s32.totalorder %s13, 0
      %p101 = por %p99, %p100
      %p102 = scmp.ne.s32.totalorder %s94, %s96
      %p103 = scmp.eq.s32.totalorder %s18, 2
      %p104 = por %p102, %p103
      %p105 = scmp.ne.s32.totalorder %s96, %s97
      %p106 = scmp.eq.s32.totalorder %s18, 0
      %p107 = por %p105, %p106
      %p108 = scmp.ne.s32.totalorder %s96, %s97
      %p109 = scmp.eq.s32.totalorder %s19, 2
      %p110 = por %p108, %p109
      %p112 = scmp.ne.s32.totalorder %s97, %s111
      %p113 = scmp.eq.s32.totalorder %s19, 0
      %p114 = por %p112, %p113
      %s116 = sadd.s32 %s115, 1
      %p119 = scmp.eq.s32.totalorder %s13, 2
      %p120 = scmp.ne.s32.totalorder %s115, %s117
      %p121 = scmp.eq.s32.totalorder %s13, 0
      %p122 = por %p120, %p121
      %p123 = scmp.ne.s32.totalorder %s115, %s117
      %p124 = scmp.eq.s32.totalorder %s18, 2
      %p125 = por %p123, %p124
      %p126 = scmp.ne.s32.totalorder %s117, %s118
      %p127 = scmp.eq.s32.totalorder %s18, 0
      %p128 = por %p126, %p127
      %p129 = scmp.ne.s32.totalorder %s117, %s118
      %p130 = scmp.eq.s32.totalorder %s19, 2
      %p131 = por %p129, %p130
      %p133 = scmp.ne.s32.totalorder %s118, %s132
      %p134 = scmp.eq.s32.totalorder %s19, 0
      %p135 = por %p133, %p134
      %s137 = sadd.s32 %s136, 1
      %p140 = scmp.eq.s32.totalorder %s13, 2
      %p141 = scmp.ne.s32.totalorder %s136, %s138
      %p142 = scmp.eq.s32.totalorder %s13, 0
      %p143 = por %p141, %p142
      %p144 = scmp.ne.s32.totalorder %s136, %s138
      %p145 = scmp.eq.s32.totalorder %s18, 2
      %p146 = por %p144, %p145
      %p147 = scmp.ne.s32.totalorder %s138, %s139
      %p148 = scmp.eq.s32.totalorder %s18, 0
      %p149 = por %p147, %p148
      %p150 = scmp.ne.s32.totalorder %s138, %s139
      %p151 = scmp.eq.s32.totalorder %s19, 2
      %p152 = por %p150, %p151
      %p154 = scmp.ne.s32.totalorder %s139, %s153
      %p155 = scmp.eq.s32.totalorder %s19, 0
      %p156 = por %p154, %p155
      %p157 = scmp.le.s32.totalorder 1, %s13
      %p158 = scmp.lt.s32.totalorder %s13, 4
      %p159 = pnand %p157, %p158
      %p160 = pneg %p159
      // Predicated region
      $region9: #{tpu_custom_call.1} parent=5 // pred_check
        _
      $region10: #{tpu_custom_call.1} parent=5 // pred_check_branch
        %162 = sbr.rel (%p159) target = $region12
      $region11: #{tpu_custom_call.1} parent=5 // pred_region
        %s163 = ssub.s32 %s13, 1
        // Predicated region
        $region13: #{tpu_custom_call.1} parent=11 // pred_check
          %p164 = pneg %p34
        $region14: #{tpu_custom_call.1} parent=11 // pred_check_branch
          %166 = sbr.rel (%p164) target = $region16
        $region15: #{tpu_custom_call.1} parent=11 // pred_region
          _
        $region16: #{tpu_custom_call.1} parent=11 // pred_fallthru
          _
        // Predicated region
        $region17: #{tpu_custom_call.1} parent=11 // pred_check
          %p167 = pneg %p107
        $region18: #{tpu_custom_call.1} parent=11 // pred_check_branch
          %169 = sbr.rel (%p167) target = $region20
        $region19: #{tpu_custom_call.1} parent=11 // pred_region
          _
        $region20: #{tpu_custom_call.1} parent=11 // pred_fallthru
          _
        // Predicated region
        $region21: #{tpu_custom_call.1} parent=11 // pred_check
          %p170 = pneg %p128
        $region22: #{tpu_custom_call.1} parent=11 // pred_check_branch
          %172 = sbr.rel (%p170) target = $region24
        $region23: #{tpu_custom_call.1} parent=11 // pred_region
          _
        $region24: #{tpu_custom_call.1} parent=11 // pred_fallthru
          _
      $region12: #{tpu_custom_call.1} parent=5 // pred_fallthru
        _
      %p173 = scmp.lt.s32.totalorder %s13, 3
      // Predicated region
      $region25: #{tpu_custom_call.1} parent=5 // pred_check
        %p174 = pneg %p173
      $region26: #{tpu_custom_call.1} parent=5 // pred_check_branch
        %176 = sbr.rel (%p174) target = $region28
      $region27: #{tpu_custom_call.1} parent=5 // pred_region
        // Predicated region
        $region29: #{tpu_custom_call.1} parent=27 // pred_check
          %p177 = pneg %p54
        $region30: #{tpu_custom_call.1} parent=27 // pred_check_branch
          %179 = sbr.rel (%p177) target = $region32
        $region31: #{tpu_custom_call.1} parent=27 // pred_region
          %s180 = smul.u32 2, %s13
          %p181 = scmp.lt.s32.totalorder %s180, 5
          %s182 = scalar_select %p181, %s180, 5
          %s183 = smul.addr %s182, 4
          %s184 = scalar_lea.vmem %s1, %s183
          %s185 = smul.u32 2, %s13
        $region32: #{tpu_custom_call.1} parent=27 // pred_fallthru
          _
        // Predicated region
        $region33: #{tpu_custom_call.1} parent=27 // pred_check
          %p186 = pneg %p80
        $region34: #{tpu_custom_call.1} parent=27 // pred_check_branch
          %188 = sbr.rel (%p186) target = $region36
        $region35: #{tpu_custom_call.1} parent=27 // pred_region
          %s189 = smul.u32 32, %s13
          %p190 = scmp.lt.s32.totalorder %s189, 95
          %s191 = scalar_select %p190, %s189, 95
          %s192 = smul.addr %s191, 4
          %s193 = scalar_lea.vmem %s2, %s192
          %s194 = smul.u32 32, %s13
        $region36: #{tpu_custom_call.1} parent=27 // pred_fallthru
          _
      $region28: #{tpu_custom_call.1} parent=5 // pred_fallthru
        _
      %p195 = scmp.le.s32.totalorder 1, %s13
      %p196 = scmp.lt.s32.totalorder %s13, 4
      %p197 = pnand %p195, %p196
      %p198 = pneg %p197
      // Predicated region
      $region37: #{tpu_custom_call.1} parent=5 // pred_check
        _
      $region38: #{tpu_custom_call.1} parent=5 // pred_check_branch
        %200 = sbr.rel (%p197) target = $region40
      $region39: #{tpu_custom_call.1} parent=5 // pred_region
        %s201 = ssub.s32 %s13, 1
        %p202 = pneg %p34
        %p203 = pneg %p31
        %s204 = smul.u32 2, %s18
        %p205 = scmp.lt.s32.totalorder %s204, 5
        %s206 = scalar_select %p205, %s204, 5
        %s207 = smul.addr %s206, 4
        %s208 = scalar_lea.vmem %s1, %s207
        %p209 = pneg %p60
        %p210 = pneg %p57
        %s211 = smul.u32 32, %s18
        %p212 = scmp.lt.s32.totalorder %s211, 95
        %s213 = scalar_select %p212, %s211, 95
        %s214 = smul.addr %s213, 4
        %s215 = scalar_lea.vmem %s2, %s214
        %p216 = pneg %p86
        %p217 = pneg %p83
        %p218 = pneg %p107
        %p219 = pneg %p104
        %p220 = pneg %p128
        %p221 = pneg %p125
        %p222 = pneg %p149
        %p223 = pneg %p146
        %s224 = smul.u32 2, %s18
        %p225 = scmp.lt.s32.totalorder %s224, 5
        %s226 = scalar_select %p225, %s224, 5
        %s227 = smul.addr %s226, 4
        %s228 = scalar_lea.vmem %s1, %s227
        %s229 = smul.u32 2, %s18
        %s230 = smul.u32 32, %s18
        %p231 = scmp.lt.s32.totalorder %s230, 95
        %s232 = scalar_select %p231, %s230, 95
        %s233 = smul.addr %s232, 4
        %s234 = scalar_lea.vmem %s2, %s233
        %s235 = smul.u32 32, %s18
        %p237 = scmp.eq.s32.totalorder %s18, 0
        // Predicated region
        $region41: #{tpu_custom_call.1} parent=39 // pred_check
          %p238 = pneg %p237
        $region42: #{tpu_custom_call.1} parent=39 // pred_check_branch
          %240 = sbr.rel (%p238) target = $region44
        $region43: #{tpu_custom_call.1} parent=39 // pred_region
          %vm241 = vcmask 523264
          %242 = vst.msk [vmem:[#allocation2] sm:$0xff] %vm241, 0.0
        $region44: #{tpu_custom_call.1} parent=39 // pred_fallthru
          _
        %v243 = vld [vmem:[#allocation2] sm:$0xff]
        %v244 = vld [vmem:[%s228] sm:$0xff]
        %v245 = vld [vmem:[%s234] sm:$0xf]
        %v246 = vld [vmem:[%s234 + $0x4] sm:$0xf]
        %v247 = vld [vmem:[%s234 + $0x8] sm:$0xf]
        %v248 = vld [vmem:[%s234 + $0xc] sm:$0xf]
        %v249 = vld [vmem:[%s234 + $0x10] sm:$0xf]
        %v250 = vld [vmem:[%s234 + $0x14] sm:$0xf]
        %v251 = vld [vmem:[%s234 + $0x18] sm:$0xf]
        %v252 = vld [vmem:[%s234 + $0x1c] sm:$0xf]
        %v253 = vld [vmem:[%s234 + $0x20] sm:$0xf]
        %v254 = vld [vmem:[%s234 + $0x24] sm:$0xf]
        %v255 = vld [vmem:[%s234 + $0x28] sm:$0xf]
        %v256 = vld [vmem:[%s234 + $0x2c] sm:$0xf]
        %v257 = vld [vmem:[%s234 + $0x30] sm:$0xf]
        %v258 = vld [vmem:[%s234 + $0x34] sm:$0xf]
        %v259 = vld [vmem:[%s234 + $0x38] sm:$0xf]
        %v260 = vld [vmem:[%s234 + $0x3c] sm:$0xf]
        %v261 = vld [vmem:[%s234 + $0x40] sm:$0xf]
        %v262 = vld [vmem:[%s234 + $0x44] sm:$0xf]
        %v263 = vld [vmem:[%s234 + $0x48] sm:$0xf]
        %v264 = vld [vmem:[%s234 + $0x4c] sm:$0xf]
        %v265 = vld [vmem:[%s234 + $0x50] sm:$0xf]
        %v266 = vld [vmem:[%s234 + $0x54] sm:$0xf]
        %v267 = vld [vmem:[%s234 + $0x58] sm:$0xf]
        %v268 = vld [vmem:[%s234 + $0x5c] sm:$0xf]
        %v269 = vld [vmem:[%s234 + $0x60] sm:$0xf]
        %v270 = vld [vmem:[%s234 + $0x64] sm:$0xf]
        %v271 = vld [vmem:[%s234 + $0x68] sm:$0xf]
        %v272 = vld [vmem:[%s234 + $0x6c] sm:$0xf]
        %v273 = vld [vmem:[%s234 + $0x70] sm:$0xf]
        %v274 = vld [vmem:[%s234 + $0x74] sm:$0xf]
        %v275 = vld [vmem:[%s234 + $0x78] sm:$0xf]
        %v276 = vld [vmem:[%s234 + $0x7c] sm:$0xf]
        %v278 = vunpack.c.l.b16 %v244
        %v279 = vunpack.c.h.b16 %v244
        %v280 = vpack.c.b16 %v278, %v278
        %v281 = vpack.c.b16 %v279, %v279
        %v316 = vunpack.c.l.b16 %v245
        %v317 = vunpack.c.l.b16 %v246
        %v318 = vunpack.c.l.b16 %v247
        %v319 = vunpack.c.l.b16 %v248
        %v320 = vunpack.c.l.b16 %v249
        %v321 = vunpack.c.l.b16 %v250
        %v322 = vunpack.c.l.b16 %v251
        %v323 = vunpack.c.l.b16 %v252
        %v324 = vunpack.c.l.b16 %v253
        %v325 = vunpack.c.l.b16 %v254
        %v326 = vunpack.c.l.b16 %v255
        %v327 = vunpack.c.l.b16 %v256
        %v328 = vunpack.c.l.b16 %v257
        %v329 = vunpack.c.l.b16 %v258
        %v330 = vunpack.c.l.b16 %v259
        %v331 = vunpack.c.l.b16 %v260
        %v332 = vunpack.c.l.b16 %v261
        %v333 = vunpack.c.l.b16 %v262
        %v334 = vunpack.c.l.b16 %v263
        %v335 = vunpack.c.l.b16 %v264
        %v336 = vunpack.c.l.b16 %v265
        %v337 = vunpack.c.l.b16 %v266
        %v338 = vunpack.c.l.b16 %v267
        %v339 = vunpack.c.l.b16 %v268
        %v340 = vunpack.c.l.b16 %v269
        %v341 = vunpack.c.l.b16 %v270
        %v342 = vunpack.c.l.b16 %v271
        %v343 = vunpack.c.l.b16 %v272
        %v344 = vunpack.c.l.b16 %v273
        %v345 = vunpack.c.l.b16 %v274
        %v346 = vunpack.c.l.b16 %v275
        %v347 = vunpack.c.l.b16 %v276
        %v348 = vpack.c.b16 %v317, %v316
        %v349 = vpack.c.b16 %v319, %v318
        %v350 = vpack.c.b16 %v321, %v320
        %v351 = vpack.c.b16 %v323, %v322
        %v352 = vpack.c.b16 %v325, %v324
        %v353 = vpack.c.b16 %v327, %v326
        %v354 = vpack.c.b16 %v329, %v328
        %v355 = vpack.c.b16 %v331, %v330
        %v356 = vpack.c.b16 %v333, %v332
        %v357 = vpack.c.b16 %v335, %v334
        %v358 = vpack.c.b16 %v337, %v336
        %v359 = vpack.c.b16 %v339, %v338
        %v360 = vpack.c.b16 %v341, %v340
        %v361 = vpack.c.b16 %v343, %v342
        %v362 = vpack.c.b16 %v345, %v344
        %v363 = vpack.c.b16 %v347, %v346
        %380 = vmatprep.subr.bf16.mxu0 0
        %381 = vmatpush1.bf16.msra.mxu0 %v355
        %382 = vmatprep.subr.bf16.mxu0 0
        %383 = vmatpush1.bf16.msra.mxu0 %v354
        %384 = vmatprep.subr.bf16.mxu0 0
        %385 = vmatpush1.bf16.msra.mxu0 %v353
        %386 = vmatprep.subr.bf16.mxu0 0
        %387 = vmatpush1.bf16.msra.mxu0 %v352
        %388 = vmatprep.subr.bf16.mxu0 0
        %389 = vmatpush1.bf16.msra.mxu0 %v351
        %390 = vmatprep.subr.bf16.mxu0 0
        %391 = vmatpush1.bf16.msra.mxu0 %v350
        %392 = vmatprep.subr.bf16.mxu0 0
        %393 = vmatpush1.bf16.msra.mxu0 %v349
        %394 = vmatprep.subr.bf16.mxu0 0
        %395 = vmatpush1.bf16.msra.mxu0 %v348
        %396 = vmatprep.subr.bf16.mxu0 0
        %397 = vmatpush2.bf16.msra.mxu0 %v363
        %398 = vmatprep.subr.bf16.mxu0 0
        %399 = vmatpush2.bf16.msra.mxu0 %v362
        %400 = vmatprep.subr.bf16.mxu0 0
        %401 = vmatpush2.bf16.msra.mxu0 %v361
        %402 = vmatprep.subr.bf16.mxu0 0
        %403 = vmatpush2.bf16.msra.mxu0 %v360
        %404 = vmatprep.subr.bf16.mxu0 0
        %405 = vmatpush2.bf16.msra.mxu0 %v359
        %406 = vmatprep.subr.bf16.mxu0 0
        %407 = vmatpush2.bf16.msra.mxu0 %v358
        %408 = vmatprep.subr.bf16.mxu0 0
        %409 = vmatpush2.bf16.msra.mxu0 %v357
        %410 = vmatprep.subr.bf16.mxu0 0
        %411 = vmatpush2.bf16.msra.mxu0 %v356
        %412 = vmatprep.mubr.bf16.mxu0 %v281
        %413 = vmatmul.mubr.bf16.gmra.mxu0 %v280
        %v414 = vpop.f32.mrf.mxu0
        %v415 = vadd.f32 0.0, %v414
        %v416 = vpop.f32.mrf.mxu0
        %v417 = vpop.f32.mrf.mxu0
        %v418 = vpop.f32.mrf.mxu0
        %419 = vdwg.mxu0
        %v420 = vadd.f32 %v243, %v415
        %vm421 = vcmask 523264
        %422 = vst.msk [vmem:[#allocation2] sm:$0xff] %vm421, %v420
        %p423 = scmp.eq.s32.totalorder %s18, 2
        // Predicated region
        $region45: #{tpu_custom_call.1} parent=39 // pred_check
          %p424 = pneg %p423
        $region46: #{tpu_custom_call.1} parent=39 // pred_check_branch
          %426 = sbr.rel (%p424) target = $region48
        $region47: #{tpu_custom_call.1} parent=39 // pred_region
          %v427 = vld [vmem:[#allocation2] sm:$0xff]
          %v428 = vmul.f32 %v427, %v427
          %v429 = vsel %vm421, %v428, 0.0
          %430 = vadd.xlane.f32.xlu0 %v429
          %v431 = vpop.xlane.xlu0 %430
          %v432 = vadd.f32 %v431, 1e-12
          %v433 = vrsqrt.pop %v432
          %v434 = vmul.f32 %v427, %v433
          %v435 = vpack.c.bf16 %v434, %v434
          %v436 = vld [vmem:[%s4] sm:$0xf]
          %v437 = vld [vmem:[%s4 + $0x4] sm:$0xf]
          %v438 = vld [vmem:[%s4 + $0x8] sm:$0xf]
          %v439 = vld [vmem:[%s4 + $0xc] sm:$0xf]
          %v440 = vld [vmem:[%s4 + $0x10] sm:$0xf]
          %v441 = vld [vmem:[%s4 + $0x14] sm:$0xf]
          %v442 = vld [vmem:[%s4 + $0x18] sm:$0xf]
          %v443 = vld [vmem:[%s4 + $0x1c] sm:$0xf]
          %v452 = vunpack.c.l.b16 %v436
          %v453 = vunpack.c.l.b16 %v437
          %v454 = vunpack.c.l.b16 %v438
          %v455 = vunpack.c.l.b16 %v439
          %v456 = vunpack.c.l.b16 %v440
          %v457 = vunpack.c.l.b16 %v441
          %v458 = vunpack.c.l.b16 %v442
          %v459 = vunpack.c.l.b16 %v443
          %v460 = vpack.c.b16 %v453, %v452
          %v461 = vpack.c.b16 %v455, %v454
          %v462 = vpack.c.b16 %v457, %v456
          %v463 = vpack.c.b16 %v459, %v458
          %v469 = vsel %vm421, %v435, 0
          %471 = vmatprep.subr.bf16.mxu0 0
          %472 = vmatpush1.bf16.msra.mxu0 0
          %473 = vmatprep.subr.bf16.mxu0 0
          %474 = vmatpush1.bf16.msra.mxu0 0
          %475 = vmatprep.subr.bf16.mxu0 0
          %476 = vmatpush1.bf16.msra.mxu0 0
          %477 = vmatprep.subr.bf16.mxu0 0
          %478 = vmatpush1.bf16.msra.mxu0 0
          %479 = vmatprep.subr.bf16.mxu0 0
          %480 = vmatpush1.bf16.msra.mxu0 %v463
          %481 = vmatprep.subr.bf16.mxu0 0
          %482 = vmatpush1.bf16.msra.mxu0 %v462
          %483 = vmatprep.subr.bf16.mxu0 0
          %484 = vmatpush1.bf16.msra.mxu0 %v461
          %485 = vmatprep.subr.bf16.mxu0 0
          %486 = vmatpush1.bf16.msra.mxu0 %v460
          %487 = vmatprep.subr.bf16.mxu0 0
          %488 = vmatpush2.bf16.msra.mxu0 0
          %489 = vmatprep.subr.bf16.mxu0 0
          %490 = vmatpush2.bf16.msra.mxu0 0
          %491 = vmatprep.subr.bf16.mxu0 0
          %492 = vmatpush2.bf16.msra.mxu0 0
          %493 = vmatprep.subr.bf16.mxu0 0
          %494 = vmatpush2.bf16.msra.mxu0 0
          %495 = vmatprep.subr.bf16.mxu0 0
          %496 = vmatpush2.bf16.msra.mxu0 0
          %497 = vmatprep.subr.bf16.mxu0 0
          %498 = vmatpush2.bf16.msra.mxu0 0
          %499 = vmatprep.subr.bf16.mxu0 0
          %500 = vmatpush2.bf16.msra.mxu0 0
          %501 = vmatprep.subr.bf16.mxu0 0
          %502 = vmatpush2.bf16.msra.mxu0 0
          %503 = vmatprep.mubr.bf16.mxu0 0
          %504 = vmatmul.mubr.bf16.gmra.mxu0 %v469
          %v505 = vpop.f32.mrf.mxu0
          %v506 = vadd.f32 0.0, %v505
          %v507 = vpop.f32.mrf.mxu0
          %v508 = vpop.f32.mrf.mxu0
          %v509 = vpop.f32.mrf.mxu0
          %510 = vdwg.mxu0
          %v511 = vld [vmem:[%s3] sm:$0xf]
          %v512 = vld [vmem:[%s3 + $0x4] sm:$0xf]
          %v513 = vld [vmem:[%s3 + $0x8] sm:$0xf]
          %v514 = vld [vmem:[%s3 + $0xc] sm:$0xf]
          %v515 = vld [vmem:[%s3 + $0x10] sm:$0xf]
          %v516 = vld [vmem:[%s3 + $0x14] sm:$0xf]
          %v517 = vld [vmem:[%s3 + $0x18] sm:$0xf]
          %v518 = vld [vmem:[%s3 + $0x1c] sm:$0xf]
          %v519 = vld [vmem:[%s3 + $0x20] sm:$0xf]
          %v520 = vld [vmem:[%s3 + $0x24] sm:$0xf]
          %v521 = vld [vmem:[%s3 + $0x28] sm:$0xf]
          %v522 = vld [vmem:[%s3 + $0x2c] sm:$0xf]
          %v523 = vld [vmem:[%s3 + $0x30] sm:$0xf]
          %v524 = vld [vmem:[%s3 + $0x34] sm:$0xf]
          %v525 = vld [vmem:[%s3 + $0x38] sm:$0xf]
          %v526 = vld [vmem:[%s3 + $0x3c] sm:$0xf]
          %v527 = vunpack.c.l.bf16 %v511
          %v528 = vunpack.c.l.bf16 %v512
          %v529 = vunpack.c.l.bf16 %v513
          %v530 = vunpack.c.l.bf16 %v514
          %v531 = vunpack.c.l.bf16 %v515
          %v532 = vunpack.c.l.bf16 %v516
          %v533 = vunpack.c.l.bf16 %v517
          %v534 = vunpack.c.l.bf16 %v518
          %v535 = vunpack.c.l.bf16 %v519
          %v536 = vunpack.c.l.bf16 %v520
          %v537 = vunpack.c.l.bf16 %v521
          %v538 = vunpack.c.l.bf16 %v522
          %v539 = vunpack.c.l.bf16 %v523
          %v540 = vunpack.c.l.bf16 %v524
          %v541 = vunpack.c.l.bf16 %v525
          %v542 = vunpack.c.l.bf16 %v526
          %v544 = vcombine.high %v506, %v506
          %v546 = vunpack.c.l.s4 1966171168
          %v547 = vunpack.c.0.s8 %v546
          %v548 = vlaneseq
          %v549 = vshrl.u32 %v548, 7
          %v550 = vsub.s32 %v547, %v549
          %v551 = vrot.slane %v506, %v550
          %v553 = vunpack.c.l.s4 1966171168
          %v554 = vunpack.c.0.s8 %v553
          %v555 = vlaneseq
          %v556 = vshrl.u32 %v555, 7
          %v557 = vsub.s32 %v554, %v556
          %v558 = vrot.slane %v544, %v557
          %v559 = vcombine.high %v551, %v551
          %v560 = vcombine.high %v558, %v558
          %v562 = vunpack.c.l.s4 1966171168
          %v563 = vunpack.c.0.s8 %v562
          %v564 = vlaneseq
          %v565 = vshrl.u32 %v564, 7
          %v566 = vsub.s32 %v563, %v565
          %v567 = vrot.slane %v551, %v566
          %v569 = vunpack.c.l.s4 1966171168
          %v570 = vunpack.c.0.s8 %v569
          %v571 = vlaneseq
          %v572 = vshrl.u32 %v571, 7
          %v573 = vsub.s32 %v570, %v572
          %v574 = vrot.slane %v558, %v573
          %v576 = vunpack.c.l.s4 1966171168
          %v577 = vunpack.c.0.s8 %v576
          %v578 = vlaneseq
          %v579 = vshrl.u32 %v578, 7
          %v580 = vsub.s32 %v577, %v579
          %v581 = vrot.slane %v559, %v580
          %v583 = vunpack.c.l.s4 1966171168
          %v584 = vunpack.c.0.s8 %v583
          %v585 = vlaneseq
          %v586 = vshrl.u32 %v585, 7
          %v587 = vsub.s32 %v584, %v586
          %v588 = vrot.slane %v560, %v587
          %v589 = vcombine.high %v567, %v567
          %v590 = vcombine.high %v574, %v574
          %v591 = vcombine.high %v581, %v581
          %v592 = vcombine.high %v588, %v588
          %v593 = vlaneseq
          %v594 = vshrl.u32 %v593, 7
          %v595 = vsub.s32 0, %v594
          %v596 = vrot.slane %v567, %v595
          %v597 = vlaneseq
          %v598 = vshrl.u32 %v597, 7
          %v599 = vsub.s32 0, %v598
          %v600 = vrot.slane %v581, %v599
          %v601 = vlaneseq
          %v602 = vshrl.u32 %v601, 7
          %v603 = vsub.s32 0, %v602
          %v604 = vrot.slane %v589, %v603
          %v605 = vlaneseq
          %v606 = vshrl.u32 %v605, 7
          %v607 = vsub.s32 0, %v606
          %v608 = vrot.slane %v591, %v607
          %v609 = vlaneseq
          %v610 = vshrl.u32 %v609, 7
          %v611 = vsub.s32 0, %v610
          %v612 = vrot.slane %v574, %v611
          %v613 = vlaneseq
          %v614 = vshrl.u32 %v613, 7
          %v615 = vsub.s32 0, %v614
          %v616 = vrot.slane %v588, %v615
          %v617 = vlaneseq
          %v618 = vshrl.u32 %v617, 7
          %v619 = vsub.s32 0, %v618
          %v620 = vrot.slane %v590, %v619
          %v621 = vlaneseq
          %v622 = vshrl.u32 %v621, 7
          %v623 = vsub.s32 0, %v622
          %v624 = vrot.slane %v592, %v623
          %v633 = vadd.f32 %v527, %v596
          %v634 = vadd.f32 %v528, %v596
          %v635 = vadd.f32 %v529, %v596
          %v636 = vadd.f32 %v530, %v596
          %v637 = vadd.f32 %v531, %v596
          %v638 = vadd.f32 %v532, %v596
          %v639 = vadd.f32 %v533, %v596
          %v640 = vadd.f32 %v534, %v596
          %v641 = vadd.f32 %v535, %v596
          %v642 = vadd.f32 %v536, %v596
          %v643 = vadd.f32 %v537, %v596
          %v644 = vadd.f32 %v538, %v596
          %v645 = vadd.f32 %v539, %v596
          %v646 = vadd.f32 %v540, %v596
          %v647 = vadd.f32 %v541, %v596
          %v648 = vadd.f32 %v542, %v596
          %v649 = vadd.f32 %v527, %v600
          %v650 = vadd.f32 %v528, %v600
          %v651 = vadd.f32 %v529, %v600
          %v652 = vadd.f32 %v530, %v600
          %v653 = vadd.f32 %v531, %v600
          %v654 = vadd.f32 %v532, %v600
          %v655 = vadd.f32 %v533, %v600
          %v656 = vadd.f32 %v534, %v600
          %v657 = vadd.f32 %v535, %v600
          %v658 = vadd.f32 %v536, %v600
          %v659 = vadd.f32 %v537, %v600
          %v660 = vadd.f32 %v538, %v600
          %v661 = vadd.f32 %v539, %v600
          %v662 = vadd.f32 %v540, %v600
          %v663 = vadd.f32 %v541, %v600
          %v664 = vadd.f32 %v542, %v600
          %v665 = vadd.f32 %v527, %v604
          %v666 = vadd.f32 %v528, %v604
          %v667 = vadd.f32 %v529, %v604
          %v668 = vadd.f32 %v530, %v604
          %v669 = vadd.f32 %v531, %v604
          %v670 = vadd.f32 %v532, %v604
          %v671 = vadd.f32 %v533, %v604
          %v672 = vadd.f32 %v534, %v604
          %v673 = vadd.f32 %v535, %v604
          %v674 = vadd.f32 %v536, %v604
          %v675 = vadd.f32 %v537, %v604
          %v676 = vadd.f32 %v538, %v604
          %v677 = vadd.f32 %v539, %v604
          %v678 = vadd.f32 %v540, %v604
          %v679 = vadd.f32 %v541, %v604
          %v680 = vadd.f32 %v542, %v604
          %v681 = vadd.f32 %v527, %v608
          %v682 = vadd.f32 %v528, %v608
          %v683 = vadd.f32 %v529, %v608
          %v684 = vadd.f32 %v530, %v608
          %v685 = vadd.f32 %v531, %v608
          %v686 = vadd.f32 %v532, %v608
          %v687 = vadd.f32 %v533, %v608
          %v688 = vadd.f32 %v534, %v608
          %v689 = vadd.f32 %v535, %v608
          %v690 = vadd.f32 %v536, %v608
          %v691 = vadd.f32 %v537, %v608
          %v692 = vadd.f32 %v538, %v608
          %v693 = vadd.f32 %v539, %v608
          %v694 = vadd.f32 %v540, %v608
          %v695 = vadd.f32 %v541, %v608
          %v696 = vadd.f32 %v542, %v608
          %v697 = vadd.f32 %v527, %v612
          %v698 = vadd.f32 %v528, %v612
          %v699 = vadd.f32 %v529, %v612
          %v700 = vadd.f32 %v530, %v612
          %v701 = vadd.f32 %v531, %v612
          %v702 = vadd.f32 %v532, %v612
          %v703 = vadd.f32 %v533, %v612
          %v704 = vadd.f32 %v534, %v612
          %v705 = vadd.f32 %v535, %v612
          %v706 = vadd.f32 %v536, %v612
          %v707 = vadd.f32 %v537, %v612
          %v708 = vadd.f32 %v538, %v612
          %v709 = vadd.f32 %v539, %v612
          %v710 = vadd.f32 %v540, %v612
          %v711 = vadd.f32 %v541, %v612
          %v712 = vadd.f32 %v542, %v612
          %v713 = vadd.f32 %v527, %v616
          %v714 = vadd.f32 %v528, %v616
          %v715 = vadd.f32 %v529, %v616
          %v716 = vadd.f32 %v530, %v616
          %v717 = vadd.f32 %v531, %v616
          %v718 = vadd.f32 %v532, %v616
          %v719 = vadd.f32 %v533, %v616
          %v720 = vadd.f32 %v534, %v616
          %v721 = vadd.f32 %v535, %v616
          %v722 = vadd.f32 %v536, %v616
          %v723 = vadd.f32 %v537, %v616
          %v724 = vadd.f32 %v538, %v616
          %v725 = vadd.f32 %v539, %v616
          %v726 = vadd.f32 %v540, %v616
          %v727 = vadd.f32 %v541, %v616
          %v728 = vadd.f32 %v542, %v616
          %v729 = vadd.f32 %v527, %v620
          %v730 = vadd.f32 %v528, %v620
          %v731 = vadd.f32 %v529, %v620
          %v732 = vadd.f32 %v530, %v620
          %v733 = vadd.f32 %v531, %v620
          %v734 = vadd.f32 %v532, %v620
          %v735 = vadd.f32 %v533, %v620
          %v736 = vadd.f32 %v534, %v620
          %v737 = vadd.f32 %v535, %v620
          %v738 = vadd.f32 %v536, %v620
          %v739 = vadd.f32 %v537, %v620
          %v740 = vadd.f32 %v538, %v620
          %v741 = vadd.f32 %v539, %v620
          %v742 = vadd.f32 %v540, %v620
          %v743 = vadd.f32 %v541, %v620
          %v744 = vadd.f32 %v542, %v620
          %v745 = vadd.f32 %v527, %v624
          %v746 = vadd.f32 %v528, %v624
          %v747 = vadd.f32 %v529, %v624
          %v748 = vadd.f32 %v530, %v624
          %v749 = vadd.f32 %v531, %v624
          %v750 = vadd.f32 %v532, %v624
          %v751 = vadd.f32 %v533, %v624
          %v752 = vadd.f32 %v534, %v624
          %v753 = vadd.f32 %v535, %v624
          %v754 = vadd.f32 %v536, %v624
          %v755 = vadd.f32 %v537, %v624
          %v756 = vadd.f32 %v538, %v624
          %v757 = vadd.f32 %v539, %v624
          %v758 = vadd.f32 %v540, %v624
          %v759 = vadd.f32 %v541, %v624
          %v760 = vadd.f32 %v542, %v624
          %v761 = vmul.f32 %v633, %v633
          %v762 = vmul.f32 %v634, %v634
          %v763 = vmul.f32 %v635, %v635
          %v764 = vmul.f32 %v636, %v636
          %v765 = vmul.f32 %v637, %v637
          %v766 = vmul.f32 %v638, %v638
          %v767 = vmul.f32 %v639, %v639
          %v768 = vmul.f32 %v640, %v640
          %v769 = vmul.f32 %v641, %v641
          %v770 = vmul.f32 %v642, %v642
          %v771 = vmul.f32 %v643, %v643
          %v772 = vmul.f32 %v644, %v644
          %v773 = vmul.f32 %v645, %v645
          %v774 = vmul.f32 %v646, %v646
          %v775 = vmul.f32 %v647, %v647
          %v776 = vmul.f32 %v648, %v648
          %v777 = vmul.f32 %v649, %v649
          %v778 = vmul.f32 %v650, %v650
          %v779 = vmul.f32 %v651, %v651
          %v780 = vmul.f32 %v652, %v652
          %v781 = vmul.f32 %v653, %v653
          %v782 = vmul.f32 %v654, %v654
          %v783 = vmul.f32 %v655, %v655
          %v784 = vmul.f32 %v656, %v656
          %v785 = vmul.f32 %v657, %v657
          %v786 = vmul.f32 %v658, %v658
          %v787 = vmul.f32 %v659, %v659
          %v788 = vmul.f32 %v660, %v660
          %v789 = vmul.f32 %v661, %v661
          %v790 = vmul.f32 %v662, %v662
          %v791 = vmul.f32 %v663, %v663
          %v792 = vmul.f32 %v664, %v664
          %v793 = vmul.f32 %v665, %v665
          %v794 = vmul.f32 %v666, %v666
          %v795 = vmul.f32 %v667, %v667
          %v796 = vmul.f32 %v668, %v668
          %v797 = vmul.f32 %v669, %v669
          %v798 = vmul.f32 %v670, %v670
          %v799 = vmul.f32 %v671, %v671
          %v800 = vmul.f32 %v672, %v672
          %v801 = vmul.f32 %v673, %v673
          %v802 = vmul.f32 %v674, %v674
          %v803 = vmul.f32 %v675, %v675
          %v804 = vmul.f32 %v676, %v676
          %v805 = vmul.f32 %v677, %v677
          %v806 = vmul.f32 %v678, %v678
          %v807 = vmul.f32 %v679, %v679
          %v808 = vmul.f32 %v680, %v680
          %v809 = vmul.f32 %v681, %v681
          %v810 = vmul.f32 %v682, %v682
          %v811 = vmul.f32 %v683, %v683
          %v812 = vmul.f32 %v684, %v684
          %v813 = vmul.f32 %v685, %v685
          %v814 = vmul.f32 %v686, %v686
          %v815 = vmul.f32 %v687, %v687
          %v816 = vmul.f32 %v688, %v688
          %v817 = vmul.f32 %v689, %v689
          %v818 = vmul.f32 %v690, %v690
          %v819 = vmul.f32 %v691, %v691
          %v820 = vmul.f32 %v692, %v692
          %v821 = vmul.f32 %v693, %v693
          %v822 = vmul.f32 %v694, %v694
          %v823 = vmul.f32 %v695, %v695
          %v824 = vmul.f32 %v696, %v696
          %v825 = vmul.f32 %v697, %v697
          %v826 = vmul.f32 %v698, %v698
          %v827 = vmul.f32 %v699, %v699
          %v828 = vmul.f32 %v700, %v700
          %v829 = vmul.f32 %v701, %v701
          %v830 = vmul.f32 %v702, %v702
          %v831 = vmul.f32 %v703, %v703
          %v832 = vmul.f32 %v704, %v704
          %v833 = vmul.f32 %v705, %v705
          %v834 = vmul.f32 %v706, %v706
          %v835 = vmul.f32 %v707, %v707
          %v836 = vmul.f32 %v708, %v708
          %v837 = vmul.f32 %v709, %v709
          %v838 = vmul.f32 %v710, %v710
          %v839 = vmul.f32 %v711, %v711
          %v840 = vmul.f32 %v712, %v712
          %v841 = vmul.f32 %v713, %v713
          %v842 = vmul.f32 %v714, %v714
          %v843 = vmul.f32 %v715, %v715
          %v844 = vmul.f32 %v716, %v716
          %v845 = vmul.f32 %v717, %v717
          %v846 = vmul.f32 %v718, %v718
          %v847 = vmul.f32 %v719, %v719
          %v848 = vmul.f32 %v720, %v720
          %v849 = vmul.f32 %v721, %v721
          %v850 = vmul.f32 %v722, %v722
          %v851 = vmul.f32 %v723, %v723
          %v852 = vmul.f32 %v724, %v724
          %v853 = vmul.f32 %v725, %v725
          %v854 = vmul.f32 %v726, %v726
          %v855 = vmul.f32 %v727, %v727
          %v856 = vmul.f32 %v728, %v728
          %v857 = vmul.f32 %v729, %v729
          %v858 = vmul.f32 %v730, %v730
          %v859 = vmul.f32 %v731, %v731
          %v860 = vmul.f32 %v732, %v732
          %v861 = vmul.f32 %v733, %v733
          %v862 = vmul.f32 %v734, %v734
          %v863 = vmul.f32 %v735, %v735
          %v864 = vmul.f32 %v736, %v736
          %v865 = vmul.f32 %v737, %v737
          %v866 = vmul.f32 %v738, %v738
          %v867 = vmul.f32 %v739, %v739
          %v868 = vmul.f32 %v740, %v740
          %v869 = vmul.f32 %v741, %v741
          %v870 = vmul.f32 %v742, %v742
          %v871 = vmul.f32 %v743, %v743
          %v872 = vmul.f32 %v744, %v744
          %v873 = vmul.f32 %v745, %v745
          %v874 = vmul.f32 %v746, %v746
          %v875 = vmul.f32 %v747, %v747
          %v876 = vmul.f32 %v748, %v748
          %v877 = vmul.f32 %v749, %v749
          %v878 = vmul.f32 %v750, %v750
          %v879 = vmul.f32 %v751, %v751
          %v880 = vmul.f32 %v752, %v752
          %v881 = vmul.f32 %v753, %v753
          %v882 = vmul.f32 %v754, %v754
          %v883 = vmul.f32 %v755, %v755
          %v884 = vmul.f32 %v756, %v756
          %v885 = vmul.f32 %v757, %v757
          %v886 = vmul.f32 %v758, %v758
          %v887 = vmul.f32 %v759, %v759
          %v888 = vmul.f32 %v760, %v760
          %v889 = vsel %vm421, %v761, 0.0
          %890 = vadd.xlane.f32.xlu0 %v889
          %v891 = vpop.xlane.xlu0 %890
          %v892 = vsel %vm421, %v762, 0.0
          %893 = vadd.xlane.f32.xlu0 %v892
          %v894 = vpop.xlane.xlu0 %893
          %v895 = vsel %vm421, %v763, 0.0
          %896 = vadd.xlane.f32.xlu0 %v895
          %v897 = vpop.xlane.xlu0 %896
          %v898 = vsel %vm421, %v764, 0.0
          %899 = vadd.xlane.f32.xlu0 %v898
          %v900 = vpop.xlane.xlu0 %899
          %v901 = vsel %vm421, %v765, 0.0
          %902 = vadd.xlane.f32.xlu0 %v901
          %v903 = vpop.xlane.xlu0 %902
          %v904 = vsel %vm421, %v766, 0.0
          %905 = vadd.xlane.f32.xlu0 %v904
          %v906 = vpop.xlane.xlu0 %905
          %v907 = vsel %vm421, %v767, 0.0
          %908 = vadd.xlane.f32.xlu0 %v907
          %v909 = vpop.xlane.xlu0 %908
          %v910 = vsel %vm421, %v768, 0.0
          %911 = vadd.xlane.f32.xlu0 %v910
          %v912 = vpop.xlane.xlu0 %911
          %v913 = vsel %vm421, %v769, 0.0
          %914 = vadd.xlane.f32.xlu0 %v913
          %v915 = vpop.xlane.xlu0 %914
          %v916 = vsel %vm421, %v770, 0.0
          %917 = vadd.xlane.f32.xlu0 %v916
          %v918 = vpop.xlane.xlu0 %917
          %v919 = vsel %vm421, %v771, 0.0
          %920 = vadd.xlane.f32.xlu0 %v919
          %v921 = vpop.xlane.xlu0 %920
          %v922 = vsel %vm421, %v772, 0.0
          %923 = vadd.xlane.f32.xlu0 %v922
          %v924 = vpop.xlane.xlu0 %923
          %v925 = vsel %vm421, %v773, 0.0
          %926 = vadd.xlane.f32.xlu0 %v925
          %v927 = vpop.xlane.xlu0 %926
          %v928 = vsel %vm421, %v774, 0.0
          %929 = vadd.xlane.f32.xlu0 %v928
          %v930 = vpop.xlane.xlu0 %929
          %v931 = vsel %vm421, %v775, 0.0
          %932 = vadd.xlane.f32.xlu0 %v931
          %v933 = vpop.xlane.xlu0 %932
          %v934 = vsel %vm421, %v776, 0.0
          %935 = vadd.xlane.f32.xlu0 %v934
          %v936 = vpop.xlane.xlu0 %935
          %v937 = vsel %vm421, %v777, 0.0
          %938 = vadd.xlane.f32.xlu0 %v937
          %v939 = vpop.xlane.xlu0 %938
          %v940 = vsel %vm421, %v778, 0.0
          %941 = vadd.xlane.f32.xlu0 %v940
          %v942 = vpop.xlane.xlu0 %941
          %v943 = vsel %vm421, %v779, 0.0
          %944 = vadd.xlane.f32.xlu0 %v943
          %v945 = vpop.xlane.xlu0 %944
          %v946 = vsel %vm421, %v780, 0.0
          %947 = vadd.xlane.f32.xlu0 %v946
          %v948 = vpop.xlane.xlu0 %947
          %v949 = vsel %vm421, %v781, 0.0
          %950 = vadd.xlane.f32.xlu0 %v949
          %v951 = vpop.xlane.xlu0 %950
          %v952 = vsel %vm421, %v782, 0.0
          %953 = vadd.xlane.f32.xlu0 %v952
          %v954 = vpop.xlane.xlu0 %953
          %v955 = vsel %vm421, %v783, 0.0
          %956 = vadd.xlane.f32.xlu0 %v955
          %v957 = vpop.xlane.xlu0 %956
          %v958 = vsel %vm421, %v784, 0.0
          %959 = vadd.xlane.f32.xlu0 %v958
          %v960 = vpop.xlane.xlu0 %959
          %v961 = vsel %vm421, %v785, 0.0
          %962 = vadd.xlane.f32.xlu0 %v961
          %v963 = vpop.xlane.xlu0 %962
          %v964 = vsel %vm421, %v786, 0.0
          %965 = vadd.xlane.f32.xlu0 %v964
          %v966 = vpop.xlane.xlu0 %965
          %v967 = vsel %vm421, %v787, 0.0
          %968 = vadd.xlane.f32.xlu0 %v967
          %v969 = vpop.xlane.xlu0 %968
          %v970 = vsel %vm421, %v788, 0.0
          %971 = vadd.xlane.f32.xlu0 %v970
          %v972 = vpop.xlane.xlu0 %971
          %v973 = vsel %vm421, %v789, 0.0
          %974 = vadd.xlane.f32.xlu0 %v973
          %v975 = vpop.xlane.xlu0 %974
          %v976 = vsel %vm421, %v790, 0.0
          %977 = vadd.xlane.f32.xlu0 %v976
          %v978 = vpop.xlane.xlu0 %977
          %v979 = vsel %vm421, %v791, 0.0
          %980 = vadd.xlane.f32.xlu0 %v979
          %v981 = vpop.xlane.xlu0 %980
          %v982 = vsel %vm421, %v792, 0.0
          %983 = vadd.xlane.f32.xlu0 %v982
          %v984 = vpop.xlane.xlu0 %983
          %v985 = vsel %vm421, %v793, 0.0
          %986 = vadd.xlane.f32.xlu0 %v985
          %v987 = vpop.xlane.xlu0 %986
          %v988 = vsel %vm421, %v794, 0.0
          %989 = vadd.xlane.f32.xlu0 %v988
          %v990 = vpop.xlane.xlu0 %989
          %v991 = vsel %vm421, %v795, 0.0
          %992 = vadd.xlane.f32.xlu0 %v991
          %v993 = vpop.xlane.xlu0 %992
          %v994 = vsel %vm421, %v796, 0.0
          %995 = vadd.xlane.f32.xlu0 %v994
          %v996 = vpop.xlane.xlu0 %995
          %v997 = vsel %vm421, %v797, 0.0
          %998 = vadd.xlane.f32.xlu0 %v997
          %v999 = vpop.xlane.xlu0 %998
          %v1000 = vsel %vm421, %v798, 0.0
          %1001 = vadd.xlane.f32.xlu0 %v1000
          %v1002 = vpop.xlane.xlu0 %1001
          %v1003 = vsel %vm421, %v799, 0.0
          %1004 = vadd.xlane.f32.xlu0 %v1003
          %v1005 = vpop.xlane.xlu0 %1004
          %v1006 = vsel %vm421, %v800, 0.0
          %1007 = vadd.xlane.f32.xlu0 %v1006
          %v1008 = vpop.xlane.xlu0 %1007
          %v1009 = vsel %vm421, %v801, 0.0
          %1010 = vadd.xlane.f32.xlu0 %v1009
          %v1011 = vpop.xlane.xlu0 %1010
          %v1012 = vsel %vm421, %v802, 0.0
          %1013 = vadd.xlane.f32.xlu0 %v1012
          %v1014 = vpop.xlane.xlu0 %1013
          %v1015 = vsel %vm421, %v803, 0.0
          %1016 = vadd.xlane.f32.xlu0 %v1015
          %v1017 = vpop.xlane.xlu0 %1016
          %v1018 = vsel %vm421, %v804, 0.0
          %1019 = vadd.xlane.f32.xlu0 %v1018
          %v1020 = vpop.xlane.xlu0 %1019
          %v1021 = vsel %vm421, %v805, 0.0
          %1022 = vadd.xlane.f32.xlu0 %v1021
          %v1023 = vpop.xlane.xlu0 %1022
          %v1024 = vsel %vm421, %v806, 0.0
          %1025 = vadd.xlane.f32.xlu0 %v1024
          %v1026 = vpop.xlane.xlu0 %1025
          %v1027 = vsel %vm421, %v807, 0.0
          %1028 = vadd.xlane.f32.xlu0 %v1027
          %v1029 = vpop.xlane.xlu0 %1028
          %v1030 = vsel %vm421, %v808, 0.0
          %1031 = vadd.xlane.f32.xlu0 %v1030
          %v1032 = vpop.xlane.xlu0 %1031
          %v1033 = vsel %vm421, %v809, 0.0
          %1034 = vadd.xlane.f32.xlu0 %v1033
          %v1035 = vpop.xlane.xlu0 %1034
          %v1036 = vsel %vm421, %v810, 0.0
          %1037 = vadd.xlane.f32.xlu0 %v1036
          %v1038 = vpop.xlane.xlu0 %1037
          %v1039 = vsel %vm421, %v811, 0.0
          %1040 = vadd.xlane.f32.xlu0 %v1039
          %v1041 = vpop.xlane.xlu0 %1040
          %v1042 = vsel %vm421, %v812, 0.0
          %1043 = vadd.xlane.f32.xlu0 %v1042
          %v1044 = vpop.xlane.xlu0 %1043
          %v1045 = vsel %vm421, %v813, 0.0
          %1046 = vadd.xlane.f32.xlu0 %v1045
          %v1047 = vpop.xlane.xlu0 %1046
          %v1048 = vsel %vm421, %v814, 0.0
          %1049 = vadd.xlane.f32.xlu0 %v1048
          %v1050 = vpop.xlane.xlu0 %1049
          %v1051 = vsel %vm421, %v815, 0.0
          %1052 = vadd.xlane.f32.xlu0 %v1051
          %v1053 = vpop.xlane.xlu0 %1052
          %v1054 = vsel %vm421, %v816, 0.0
          %1055 = vadd.xlane.f32.xlu0 %v1054
          %v1056 = vpop.xlane.xlu0 %1055
          %v1057 = vsel %vm421, %v817, 0.0
          %1058 = vadd.xlane.f32.xlu0 %v1057
          %v1059 = vpop.xlane.xlu0 %1058
          %v1060 = vsel %vm421, %v818, 0.0
          %1061 = vadd.xlane.f32.xlu0 %v1060
          %v1062 = vpop.xlane.xlu0 %1061
          %v1063 = vsel %vm421, %v819, 0.0
          %1064 = vadd.xlane.f32.xlu0 %v1063
          %v1065 = vpop.xlane.xlu0 %1064
          %v1066 = vsel %vm421, %v820, 0.0
          %1067 = vadd.xlane.f32.xlu0 %v1066
          %v1068 = vpop.xlane.xlu0 %1067
          %v1069 = vsel %vm421, %v821, 0.0
          %1070 = vadd.xlane.f32.xlu0 %v1069
          %v1071 = vpop.xlane.xlu0 %1070
          %v1072 = vsel %vm421, %v822, 0.0
          %1073 = vadd.xlane.f32.xlu0 %v1072
          %v1074 = vpop.xlane.xlu0 %1073
          %v1075 = vsel %vm421, %v823, 0.0
          %1076 = vadd.xlane.f32.xlu0 %v1075
          %v1077 = vpop.xlane.xlu0 %1076
          %v1078 = vsel %vm421, %v824, 0.0
          %1079 = vadd.xlane.f32.xlu0 %v1078
          %v1080 = vpop.xlane.xlu0 %1079
          %v1081 = vsel %vm421, %v825, 0.0
          %1082 = vadd.xlane.f32.xlu0 %v1081
          %v1083 = vpop.xlane.xlu0 %1082
          %v1084 = vsel %vm421, %v826, 0.0
          %1085 = vadd.xlane.f32.xlu0 %v1084
          %v1086 = vpop.xlane.xlu0 %1085
          %v1087 = vsel %vm421, %v827, 0.0
          %1088 = vadd.xlane.f32.xlu0 %v1087
          %v1089 = vpop.xlane.xlu0 %1088
          %v1090 = vsel %vm421, %v828, 0.0
          %1091 = vadd.xlane.f32.xlu0 %v1090
          %v1092 = vpop.xlane.xlu0 %1091
          %v1093 = vsel %vm421, %v829, 0.0
          %1094 = vadd.xlane.f32.xlu0 %v1093
          %v1095 = vpop.xlane.xlu0 %1094
          %v1096 = vsel %vm421, %v830, 0.0
          %1097 = vadd.xlane.f32.xlu0 %v1096
          %v1098 = vpop.xlane.xlu0 %1097
          %v1099 = vsel %vm421, %v831, 0.0
          %1100 = vadd.xlane.f32.xlu0 %v1099
          %v1101 = vpop.xlane.xlu0 %1100
          %v1102 = vsel %vm421, %v832, 0.0
          %1103 = vadd.xlane.f32.xlu0 %v1102
          %v1104 = vpop.xlane.xlu0 %1103
          %v1105 = vsel %vm421, %v833, 0.0
          %1106 = vadd.xlane.f32.xlu0 %v1105
          %v1107 = vpop.xlane.xlu0 %1106
          %v1108 = vsel %vm421, %v834, 0.0
          %1109 = vadd.xlane.f32.xlu0 %v1108
          %v1110 = vpop.xlane.xlu0 %1109
          %v1111 = vsel %vm421, %v835, 0.0
          %1112 = vadd.xlane.f32.xlu0 %v1111
          %v1113 = vpop.xlane.xlu0 %1112
          %v1114 = vsel %vm421, %v836, 0.0
          %1115 = vadd.xlane.f32.xlu0 %v1114
          %v1116 = vpop.xlane.xlu0 %1115
          %v1117 = vsel %vm421, %v837, 0.0
          %1118 = vadd.xlane.f32.xlu0 %v1117
          %v1119 = vpop.xlane.xlu0 %1118
          %v1120 = vsel %vm421, %v838, 0.0
          %1121 = vadd.xlane.f32.xlu0 %v1120
          %v1122 = vpop.xlane.xlu0 %1121
          %v1123 = vsel %vm421, %v839, 0.0
          %1124 = vadd.xlane.f32.xlu0 %v1123
          %v1125 = vpop.xlane.xlu0 %1124
          %v1126 = vsel %vm421, %v840, 0.0
          %1127 = vadd.xlane.f32.xlu0 %v1126
          %v1128 = vpop.xlane.xlu0 %1127
          %v1129 = vsel %vm421, %v841, 0.0
          %1130 = vadd.xlane.f32.xlu0 %v1129
          %v1131 = vpop.xlane.xlu0 %1130
          %v1132 = vsel %vm421, %v842, 0.0
          %1133 = vadd.xlane.f32.xlu0 %v1132
          %v1134 = vpop.xlane.xlu0 %1133
          %v1135 = vsel %vm421, %v843, 0.0
          %1136 = vadd.xlane.f32.xlu0 %v1135
          %v1137 = vpop.xlane.xlu0 %1136
          %v1138 = vsel %vm421, %v844, 0.0
          %1139 = vadd.xlane.f32.xlu0 %v1138
          %v1140 = vpop.xlane.xlu0 %1139
          %v1141 = vsel %vm421, %v845, 0.0
          %1142 = vadd.xlane.f32.xlu0 %v1141
          %v1143 = vpop.xlane.xlu0 %1142
          %v1144 = vsel %vm421, %v846, 0.0
          %1145 = vadd.xlane.f32.xlu0 %v1144
          %v1146 = vpop.xlane.xlu0 %1145
          %v1147 = vsel %vm421, %v847, 0.0
          %1148 = vadd.xlane.f32.xlu0 %v1147
          %v1149 = vpop.xlane.xlu0 %1148
          %v1150 = vsel %vm421, %v848, 0.0
          %1151 = vadd.xlane.f32.xlu0 %v1150
          %v1152 = vpop.xlane.xlu0 %1151
          %v1153 = vsel %vm421, %v849, 0.0
          %1154 = vadd.xlane.f32.xlu0 %v1153
          %v1155 = vpop.xlane.xlu0 %1154
          %v1156 = vsel %vm421, %v850, 0.0
          %1157 = vadd.xlane.f32.xlu0 %v1156
          %v1158 = vpop.xlane.xlu0 %1157
          %v1159 = vsel %vm421, %v851, 0.0
          %1160 = vadd.xlane.f32.xlu0 %v1159
          %v1161 = vpop.xlane.xlu0 %1160
          %v1162 = vsel %vm421, %v852, 0.0
          %1163 = vadd.xlane.f32.xlu0 %v1162
          %v1164 = vpop.xlane.xlu0 %1163
          %v1165 = vsel %vm421, %v853, 0.0
          %1166 = vadd.xlane.f32.xlu0 %v1165
          %v1167 = vpop.xlane.xlu0 %1166
          %v1168 = vsel %vm421, %v854, 0.0
          %1169 = vadd.xlane.f32.xlu0 %v1168
          %v1170 = vpop.xlane.xlu0 %1169
          %v1171 = vsel %vm421, %v855, 0.0
          %1172 = vadd.xlane.f32.xlu0 %v1171
          %v1173 = vpop.xlane.xlu0 %1172
          %v1174 = vsel %vm421, %v856, 0.0
          %1175 = vadd.xlane.f32.xlu0 %v1174
          %v1176 = vpop.xlane.xlu0 %1175
          %v1177 = vsel %vm421, %v857, 0.0
          %1178 = vadd.xlane.f32.xlu0 %v1177
          %v1179 = vpop.xlane.xlu0 %1178
          %v1180 = vsel %vm421, %v858, 0.0
          %1181 = vadd.xlane.f32.xlu0 %v1180
          %v1182 = vpop.xlane.xlu0 %1181
          %v1183 = vsel %vm421, %v859, 0.0
          %1184 = vadd.xlane.f32.xlu0 %v1183
          %v1185 = vpop.xlane.xlu0 %1184
          %v1186 = vsel %vm421, %v860, 0.0
          %1187 = vadd.xlane.f32.xlu0 %v1186
          %v1188 = vpop.xlane.xlu0 %1187
          %v1189 = vsel %vm421, %v861, 0.0
          %1190 = vadd.xlane.f32.xlu0 %v1189
          %v1191 = vpop.xlane.xlu0 %1190
          %v1192 = vsel %vm421, %v862, 0.0
          %1193 = vadd.xlane.f32.xlu0 %v1192
          %v1194 = vpop.xlane.xlu0 %1193
          %v1195 = vsel %vm421, %v863, 0.0
          %1196 = vadd.xlane.f32.xlu0 %v1195
          %v1197 = vpop.xlane.xlu0 %1196
          %v1198 = vsel %vm421, %v864, 0.0
          %1199 = vadd.xlane.f32.xlu0 %v1198
          %v1200 = vpop.xlane.xlu0 %1199
          %v1201 = vsel %vm421, %v865, 0.0
          %1202 = vadd.xlane.f32.xlu0 %v1201
          %v1203 = vpop.xlane.xlu0 %1202
          %v1204 = vsel %vm421, %v866, 0.0
          %1205 = vadd.xlane.f32.xlu0 %v1204
          %v1206 = vpop.xlane.xlu0 %1205
          %v1207 = vsel %vm421, %v867, 0.0
          %1208 = vadd.xlane.f32.xlu0 %v1207
          %v1209 = vpop.xlane.xlu0 %1208
          %v1210 = vsel %vm421, %v868, 0.0
          %1211 = vadd.xlane.f32.xlu0 %v1210
          %v1212 = vpop.xlane.xlu0 %1211
          %v1213 = vsel %vm421, %v869, 0.0
          %1214 = vadd.xlane.f32.xlu0 %v1213
          %v1215 = vpop.xlane.xlu0 %1214
          %v1216 = vsel %vm421, %v870, 0.0
          %1217 = vadd.xlane.f32.xlu0 %v1216
          %v1218 = vpop.xlane.xlu0 %1217
          %v1219 = vsel %vm421, %v871, 0.0
          %1220 = vadd.xlane.f32.xlu0 %v1219
          %v1221 = vpop.xlane.xlu0 %1220
          %v1222 = vsel %vm421, %v872, 0.0
          %1223 = vadd.xlane.f32.xlu0 %v1222
          %v1224 = vpop.xlane.xlu0 %1223
          %v1225 = vsel %vm421, %v873, 0.0
          %1226 = vadd.xlane.f32.xlu0 %v1225
          %v1227 = vpop.xlane.xlu0 %1226
          %v1228 = vsel %vm421, %v874, 0.0
          %1229 = vadd.xlane.f32.xlu0 %v1228
          %v1230 = vpop.xlane.xlu0 %1229
          %v1231 = vsel %vm421, %v875, 0.0
          %1232 = vadd.xlane.f32.xlu0 %v1231
          %v1233 = vpop.xlane.xlu0 %1232
          %v1234 = vsel %vm421, %v876, 0.0
          %1235 = vadd.xlane.f32.xlu0 %v1234
          %v1236 = vpop.xlane.xlu0 %1235
          %v1237 = vsel %vm421, %v877, 0.0
          %1238 = vadd.xlane.f32.xlu0 %v1237
          %v1239 = vpop.xlane.xlu0 %1238
          %v1240 = vsel %vm421, %v878, 0.0
          %1241 = vadd.xlane.f32.xlu0 %v1240
          %v1242 = vpop.xlane.xlu0 %1241
          %v1243 = vsel %vm421, %v879, 0.0
          %1244 = vadd.xlane.f32.xlu0 %v1243
          %v1245 = vpop.xlane.xlu0 %1244
          %v1246 = vsel %vm421, %v880, 0.0
          %1247 = vadd.xlane.f32.xlu0 %v1246
          %v1248 = vpop.xlane.xlu0 %1247
          %v1249 = vsel %vm421, %v881, 0.0
          %1250 = vadd.xlane.f32.xlu0 %v1249
          %v1251 = vpop.xlane.xlu0 %1250
          %v1252 = vsel %vm421, %v882, 0.0
          %1253 = vadd.xlane.f32.xlu0 %v1252
          %v1254 = vpop.xlane.xlu0 %1253
          %v1255 = vsel %vm421, %v883, 0.0
          %1256 = vadd.xlane.f32.xlu0 %v1255
          %v1257 = vpop.xlane.xlu0 %1256
          %v1258 = vsel %vm421, %v884, 0.0
          %1259 = vadd.xlane.f32.xlu0 %v1258
          %v1260 = vpop.xlane.xlu0 %1259
          %v1261 = vsel %vm421, %v885, 0.0
          %1262 = vadd.xlane.f32.xlu0 %v1261
          %v1263 = vpop.xlane.xlu0 %1262
          %v1264 = vsel %vm421, %v886, 0.0
          %1265 = vadd.xlane.f32.xlu0 %v1264
          %v1266 = vpop.xlane.xlu0 %1265
          %v1267 = vsel %vm421, %v887, 0.0
          %1268 = vadd.xlane.f32.xlu0 %v1267
          %v1269 = vpop.xlane.xlu0 %1268
          %v1270 = vsel %vm421, %v888, 0.0
          %1271 = vadd.xlane.f32.xlu0 %v1270
          %v1272 = vpop.xlane.xlu0 %1271
          %v1273 = vadd.f32 %v891, 1e-12
          %v1274 = vadd.f32 %v894, 1e-12
          %v1275 = vadd.f32 %v897, 1e-12
          %v1276 = vadd.f32 %v900, 1e-12
          %v1277 = vadd.f32 %v903, 1e-12
          %v1278 = vadd.f32 %v906, 1e-12
          %v1279 = vadd.f32 %v909, 1e-12
          %v1280 = vadd.f32 %v912, 1e-12
          %v1281 = vadd.f32 %v915, 1e-12
          %v1282 = vadd.f32 %v918, 1e-12
          %v1283 = vadd.f32 %v921, 1e-12
          %v1284 = vadd.f32 %v924, 1e-12
          %v1285 = vadd.f32 %v927, 1e-12
          %v1286 = vadd.f32 %v930, 1e-12
          %v1287 = vadd.f32 %v933, 1e-12
          %v1288 = vadd.f32 %v936, 1e-12
          %v1289 = vadd.f32 %v939, 1e-12
          %v1290 = vadd.f32 %v942, 1e-12
          %v1291 = vadd.f32 %v945, 1e-12
          %v1292 = vadd.f32 %v948, 1e-12
          %v1293 = vadd.f32 %v951, 1e-12
          %v1294 = vadd.f32 %v954, 1e-12
          %v1295 = vadd.f32 %v957, 1e-12
          %v1296 = vadd.f32 %v960, 1e-12
          %v1297 = vadd.f32 %v963, 1e-12
          %v1298 = vadd.f32 %v966, 1e-12
          %v1299 = vadd.f32 %v969, 1e-12
          %v1300 = vadd.f32 %v972, 1e-12
          %v1301 = vadd.f32 %v975, 1e-12
          %v1302 = vadd.f32 %v978, 1e-12
          %v1303 = vadd.f32 %v981, 1e-12
          %v1304 = vadd.f32 %v984, 1e-12
          %v1305 = vadd.f32 %v987, 1e-12
          %v1306 = vadd.f32 %v990, 1e-12
          %v1307 = vadd.f32 %v993, 1e-12
          %v1308 = vadd.f32 %v996, 1e-12
          %v1309 = vadd.f32 %v999, 1e-12
          %v1310 = vadd.f32 %v1002, 1e-12
          %v1311 = vadd.f32 %v1005, 1e-12
          %v1312 = vadd.f32 %v1008, 1e-12
          %v1313 = vadd.f32 %v1011, 1e-12
          %v1314 = vadd.f32 %v1014, 1e-12
          %v1315 = vadd.f32 %v1017, 1e-12
          %v1316 = vadd.f32 %v1020, 1e-12
          %v1317 = vadd.f32 %v1023, 1e-12
          %v1318 = vadd.f32 %v1026, 1e-12
          %v1319 = vadd.f32 %v1029, 1e-12
          %v1320 = vadd.f32 %v1032, 1e-12
          %v1321 = vadd.f32 %v1035, 1e-12
          %v1322 = vadd.f32 %v1038, 1e-12
          %v1323 = vadd.f32 %v1041, 1e-12
          %v1324 = vadd.f32 %v1044, 1e-12
          %v1325 = vadd.f32 %v1047, 1e-12
          %v1326 = vadd.f32 %v1050, 1e-12
          %v1327 = vadd.f32 %v1053, 1e-12
          %v1328 = vadd.f32 %v1056, 1e-12
          %v1329 = vadd.f32 %v1059, 1e-12
          %v1330 = vadd.f32 %v1062, 1e-12
          %v1331 = vadd.f32 %v1065, 1e-12
          %v1332 = vadd.f32 %v1068, 1e-12
          %v1333 = vadd.f32 %v1071, 1e-12
          %v1334 = vadd.f32 %v1074, 1e-12
          %v1335 = vadd.f32 %v1077, 1e-12
          %v1336 = vadd.f32 %v1080, 1e-12
          %v1337 = vadd.f32 %v1083, 1e-12
          %v1338 = vadd.f32 %v1086, 1e-12
          %v1339 = vadd.f32 %v1089, 1e-12
          %v1340 = vadd.f32 %v1092, 1e-12
          %v1341 = vadd.f32 %v1095, 1e-12
          %v1342 = vadd.f32 %v1098, 1e-12
          %v1343 = vadd.f32 %v1101, 1e-12
          %v1344 = vadd.f32 %v1104, 1e-12
          %v1345 = vadd.f32 %v1107, 1e-12
          %v1346 = vadd.f32 %v1110, 1e-12
          %v1347 = vadd.f32 %v1113, 1e-12
          %v1348 = vadd.f32 %v1116, 1e-12
          %v1349 = vadd.f32 %v1119, 1e-12
          %v1350 = vadd.f32 %v1122, 1e-12
          %v1351 = vadd.f32 %v1125, 1e-12
          %v1352 = vadd.f32 %v1128, 1e-12
          %v1353 = vadd.f32 %v1131, 1e-12
          %v1354 = vadd.f32 %v1134, 1e-12
          %v1355 = vadd.f32 %v1137, 1e-12
          %v1356 = vadd.f32 %v1140, 1e-12
          %v1357 = vadd.f32 %v1143, 1e-12
          %v1358 = vadd.f32 %v1146, 1e-12
          %v1359 = vadd.f32 %v1149, 1e-12
          %v1360 = vadd.f32 %v1152, 1e-12
          %v1361 = vadd.f32 %v1155, 1e-12
          %v1362 = vadd.f32 %v1158, 1e-12
          %v1363 = vadd.f32 %v1161, 1e-12
          %v1364 = vadd.f32 %v1164, 1e-12
          %v1365 = vadd.f32 %v1167, 1e-12
          %v1366 = vadd.f32 %v1170, 1e-12
          %v1367 = vadd.f32 %v1173, 1e-12
          %v1368 = vadd.f32 %v1176, 1e-12
          %v1369 = vadd.f32 %v1179, 1e-12
          %v1370 = vadd.f32 %v1182, 1e-12
          %v1371 = vadd.f32 %v1185, 1e-12
          %v1372 = vadd.f32 %v1188, 1e-12
          %v1373 = vadd.f32 %v1191, 1e-12
          %v1374 = vadd.f32 %v1194, 1e-12
          %v1375 = vadd.f32 %v1197, 1e-12
          %v1376 = vadd.f32 %v1200, 1e-12
          %v1377 = vadd.f32 %v1203, 1e-12
          %v1378 = vadd.f32 %v1206, 1e-12
          %v1379 = vadd.f32 %v1209, 1e-12
          %v1380 = vadd.f32 %v1212, 1e-12
          %v1381 = vadd.f32 %v1215, 1e-12
          %v1382 = vadd.f32 %v1218, 1e-12
          %v1383 = vadd.f32 %v1221, 1e-12
          %v1384 = vadd.f32 %v1224, 1e-12
          %v1385 = vadd.f32 %v1227, 1e-12
          %v1386 = vadd.f32 %v1230, 1e-12
          %v1387 = vadd.f32 %v1233, 1e-12
          %v1388 = vadd.f32 %v1236, 1e-12
          %v1389 = vadd.f32 %v1239, 1e-12
          %v1390 = vadd.f32 %v1242, 1e-12
          %v1391 = vadd.f32 %v1245, 1e-12
          %v1392 = vadd.f32 %v1248, 1e-12
          %v1393 = vadd.f32 %v1251, 1e-12
          %v1394 = vadd.f32 %v1254, 1e-12
          %v1395 = vadd.f32 %v1257, 1e-12
          %v1396 = vadd.f32 %v1260, 1e-12
          %v1397 = vadd.f32 %v1263, 1e-12
          %v1398 = vadd.f32 %v1266, 1e-12
          %v1399 = vadd.f32 %v1269, 1e-12
          %v1400 = vadd.f32 %v1272, 1e-12
          %v1401 = vrsqrt.pop %v1273
          %v1402 = vrsqrt.pop %v1274
          %v1403 = vrsqrt.pop %v1275
          %v1404 = vrsqrt.pop %v1276
          %v1405 = vrsqrt.pop %v1277
          %v1406 = vrsqrt.pop %v1278
          %v1407 = vrsqrt.pop %v1279
          %v1408 = vrsqrt.pop %v1280
          %v1409 = vrsqrt.pop %v1281
          %v1410 = vrsqrt.pop %v1282
          %v1411 = vrsqrt.pop %v1283
          %v1412 = vrsqrt.pop %v1284
          %v1413 = vrsqrt.pop %v1285
          %v1414 = vrsqrt.pop %v1286
          %v1415 = vrsqrt.pop %v1287
          %v1416 = vrsqrt.pop %v1288
          %v1417 = vrsqrt.pop %v1289
          %v1418 = vrsqrt.pop %v1290
          %v1419 = vrsqrt.pop %v1291
          %v1420 = vrsqrt.pop %v1292
          %v1421 = vrsqrt.pop %v1293
          %v1422 = vrsqrt.pop %v1294
          %v1423 = vrsqrt.pop %v1295
          %v1424 = vrsqrt.pop %v1296
          %v1425 = vrsqrt.pop %v1297
          %v1426 = vrsqrt.pop %v1298
          %v1427 = vrsqrt.pop %v1299
          %v1428 = vrsqrt.pop %v1300
          %v1429 = vrsqrt.pop %v1301
          %v1430 = vrsqrt.pop %v1302
          %v1431 = vrsqrt.pop %v1303
          %v1432 = vrsqrt.pop %v1304
          %v1433 = vrsqrt.pop %v1305
          %v1434 = vrsqrt.pop %v1306
          %v1435 = vrsqrt.pop %v1307
          %v1436 = vrsqrt.pop %v1308
          %v1437 = vrsqrt.pop %v1309
          %v1438 = vrsqrt.pop %v1310
          %v1439 = vrsqrt.pop %v1311
          %v1440 = vrsqrt.pop %v1312
          %v1441 = vrsqrt.pop %v1313
          %v1442 = vrsqrt.pop %v1314
          %v1443 = vrsqrt.pop %v1315
          %v1444 = vrsqrt.pop %v1316
          %v1445 = vrsqrt.pop %v1317
          %v1446 = vrsqrt.pop %v1318
          %v1447 = vrsqrt.pop %v1319
          %v1448 = vrsqrt.pop %v1320
          %v1449 = vrsqrt.pop %v1321
          %v1450 = vrsqrt.pop %v1322
          %v1451 = vrsqrt.pop %v1323
          %v1452 = vrsqrt.pop %v1324
          %v1453 = vrsqrt.pop %v1325
          %v1454 = vrsqrt.pop %v1326
          %v1455 = vrsqrt.pop %v1327
          %v1456 = vrsqrt.pop %v1328
          %v1457 = vrsqrt.pop %v1329
          %v1458 = vrsqrt.pop %v1330
          %v1459 = vrsqrt.pop %v1331
          %v1460 = vrsqrt.pop %v1332
          %v1461 = vrsqrt.pop %v1333
          %v1462 = vrsqrt.pop %v1334
          %v1463 = vrsqrt.pop %v1335
          %v1464 = vrsqrt.pop %v1336
          %v1465 = vrsqrt.pop %v1337
          %v1466 = vrsqrt.pop %v1338
          %v1467 = vrsqrt.pop %v1339
          %v1468 = vrsqrt.pop %v1340
          %v1469 = vrsqrt.pop %v1341
          %v1470 = vrsqrt.pop %v1342
          %v1471 = vrsqrt.pop %v1343
          %v1472 = vrsqrt.pop %v1344
          %v1473 = vrsqrt.pop %v1345
          %v1474 = vrsqrt.pop %v1346
          %v1475 = vrsqrt.pop %v1347
          %v1476 = vrsqrt.pop %v1348
          %v1477 = vrsqrt.pop %v1349
          %v1478 = vrsqrt.pop %v1350
          %v1479 = vrsqrt.pop %v1351
          %v1480 = vrsqrt.pop %v1352
          %v1481 = vrsqrt.pop %v1353
          %v1482 = vrsqrt.pop %v1354
          %v1483 = vrsqrt.pop %v1355
          %v1484 = vrsqrt.pop %v1356
          %v1485 = vrsqrt.pop %v1357
          %v1486 = vrsqrt.pop %v1358
          %v1487 = vrsqrt.pop %v1359
          %v1488 = vrsqrt.pop %v1360
          %v1489 = vrsqrt.pop %v1361
          %v1490 = vrsqrt.pop %v1362
          %v1491 = vrsqrt.pop %v1363
          %v1492 = vrsqrt.pop %v1364
          %v1493 = vrsqrt.pop %v1365
          %v1494 = vrsqrt.pop %v1366
          %v1495 = vrsqrt.pop %v1367
          %v1496 = vrsqrt.pop %v1368
          %v1497 = vrsqrt.pop %v1369
          %v1498 = vrsqrt.pop %v1370
          %v1499 = vrsqrt.pop %v1371
          %v1500 = vrsqrt.pop %v1372
          %v1501 = vrsqrt.pop %v1373
          %v1502 = vrsqrt.pop %v1374
          %v1503 = vrsqrt.pop %v1375
          %v1504 = vrsqrt.pop %v1376
          %v1505 = vrsqrt.pop %v1377
          %v1506 = vrsqrt.pop %v1378
          %v1507 = vrsqrt.pop %v1379
          %v1508 = vrsqrt.pop %v1380
          %v1509 = vrsqrt.pop %v1381
          %v1510 = vrsqrt.pop %v1382
          %v1511 = vrsqrt.pop %v1383
          %v1512 = vrsqrt.pop %v1384
          %v1513 = vrsqrt.pop %v1385
          %v1514 = vrsqrt.pop %v1386
          %v1515 = vrsqrt.pop %v1387
          %v1516 = vrsqrt.pop %v1388
          %v1517 = vrsqrt.pop %v1389
          %v1518 = vrsqrt.pop %v1390
          %v1519 = vrsqrt.pop %v1391
          %v1520 = vrsqrt.pop %v1392
          %v1521 = vrsqrt.pop %v1393
          %v1522 = vrsqrt.pop %v1394
          %v1523 = vrsqrt.pop %v1395
          %v1524 = vrsqrt.pop %v1396
          %v1525 = vrsqrt.pop %v1397
          %v1526 = vrsqrt.pop %v1398
          %v1527 = vrsqrt.pop %v1399
          %v1528 = vrsqrt.pop %v1400
          %v1529 = vmul.f32 %v633, %v1401
          %v1530 = vmul.f32 %v634, %v1402
          %v1531 = vmul.f32 %v635, %v1403
          %v1532 = vmul.f32 %v636, %v1404
          %v1533 = vmul.f32 %v637, %v1405
          %v1534 = vmul.f32 %v638, %v1406
          %v1535 = vmul.f32 %v639, %v1407
          %v1536 = vmul.f32 %v640, %v1408
          %v1537 = vmul.f32 %v641, %v1409
          %v1538 = vmul.f32 %v642, %v1410
          %v1539 = vmul.f32 %v643, %v1411
          %v1540 = vmul.f32 %v644, %v1412
          %v1541 = vmul.f32 %v645, %v1413
          %v1542 = vmul.f32 %v646, %v1414
          %v1543 = vmul.f32 %v647, %v1415
          %v1544 = vmul.f32 %v648, %v1416
          %v1545 = vmul.f32 %v649, %v1417
          %v1546 = vmul.f32 %v650, %v1418
          %v1547 = vmul.f32 %v651, %v1419
          %v1548 = vmul.f32 %v652, %v1420
          %v1549 = vmul.f32 %v653, %v1421
          %v1550 = vmul.f32 %v654, %v1422
          %v1551 = vmul.f32 %v655, %v1423
          %v1552 = vmul.f32 %v656, %v1424
          %v1553 = vmul.f32 %v657, %v1425
          %v1554 = vmul.f32 %v658, %v1426
          %v1555 = vmul.f32 %v659, %v1427
          %v1556 = vmul.f32 %v660, %v1428
          %v1557 = vmul.f32 %v661, %v1429
          %v1558 = vmul.f32 %v662, %v1430
          %v1559 = vmul.f32 %v663, %v1431
          %v1560 = vmul.f32 %v664, %v1432
          %v1561 = vmul.f32 %v665, %v1433
          %v1562 = vmul.f32 %v666, %v1434
          %v1563 = vmul.f32 %v667, %v1435
          %v1564 = vmul.f32 %v668, %v1436
          %v1565 = vmul.f32 %v669, %v1437
          %v1566 = vmul.f32 %v670, %v1438
          %v1567 = vmul.f32 %v671, %v1439
          %v1568 = vmul.f32 %v672, %v1440
          %v1569 = vmul.f32 %v673, %v1441
          %v1570 = vmul.f32 %v674, %v1442
          %v1571 = vmul.f32 %v675, %v1443
          %v1572 = vmul.f32 %v676, %v1444
          %v1573 = vmul.f32 %v677, %v1445
          %v1574 = vmul.f32 %v678, %v1446
          %v1575 = vmul.f32 %v679, %v1447
          %v1576 = vmul.f32 %v680, %v1448
          %v1577 = vmul.f32 %v681, %v1449
          %v1578 = vmul.f32 %v682, %v1450
          %v1579 = vmul.f32 %v683, %v1451
          %v1580 = vmul.f32 %v684, %v1452
          %v1581 = vmul.f32 %v685, %v1453
          %v1582 = vmul.f32 %v686, %v1454
          %v1583 = vmul.f32 %v687, %v1455
          %v1584 = vmul.f32 %v688, %v1456
          %v1585 = vmul.f32 %v689, %v1457
          %v1586 = vmul.f32 %v690, %v1458
          %v1587 = vmul.f32 %v691, %v1459
          %v1588 = vmul.f32 %v692, %v1460
          %v1589 = vmul.f32 %v693, %v1461
          %v1590 = vmul.f32 %v694, %v1462
          %v1591 = vmul.f32 %v695, %v1463
          %v1592 = vmul.f32 %v696, %v1464
          %v1593 = vmul.f32 %v697, %v1465
          %v1594 = vmul.f32 %v698, %v1466
          %v1595 = vmul.f32 %v699, %v1467
          %v1596 = vmul.f32 %v700, %v1468
          %v1597 = vmul.f32 %v701, %v1469
          %v1598 = vmul.f32 %v702, %v1470
          %v1599 = vmul.f32 %v703, %v1471
          %v1600 = vmul.f32 %v704, %v1472
          %v1601 = vmul.f32 %v705, %v1473
          %v1602 = vmul.f32 %v706, %v1474
          %v1603 = vmul.f32 %v707, %v1475
          %v1604 = vmul.f32 %v708, %v1476
          %v1605 = vmul.f32 %v709, %v1477
          %v1606 = vmul.f32 %v710, %v1478
          %v1607 = vmul.f32 %v711, %v1479
          %v1608 = vmul.f32 %v712, %v1480
          %v1609 = vmul.f32 %v713, %v1481
          %v1610 = vmul.f32 %v714, %v1482
          %v1611 = vmul.f32 %v715, %v1483
          %v1612 = vmul.f32 %v716, %v1484
          %v1613 = vmul.f32 %v717, %v1485
          %v1614 = vmul.f32 %v718, %v1486
          %v1615 = vmul.f32 %v719, %v1487
          %v1616 = vmul.f32 %v720, %v1488
          %v1617 = vmul.f32 %v721, %v1489
          %v1618 = vmul.f32 %v722, %v1490
          %v1619 = vmul.f32 %v723, %v1491
          %v1620 = vmul.f32 %v724, %v1492
          %v1621 = vmul.f32 %v725, %v1493
          %v1622 = vmul.f32 %v726, %v1494
          %v1623 = vmul.f32 %v727, %v1495
          %v1624 = vmul.f32 %v728, %v1496
          %v1625 = vmul.f32 %v729, %v1497
          %v1626 = vmul.f32 %v730, %v1498
          %v1627 = vmul.f32 %v731, %v1499
          %v1628 = vmul.f32 %v732, %v1500
          %v1629 = vmul.f32 %v733, %v1501
          %v1630 = vmul.f32 %v734, %v1502
          %v1631 = vmul.f32 %v735, %v1503
          %v1632 = vmul.f32 %v736, %v1504
          %v1633 = vmul.f32 %v737, %v1505
          %v1634 = vmul.f32 %v738, %v1506
          %v1635 = vmul.f32 %v739, %v1507
          %v1636 = vmul.f32 %v740, %v1508
          %v1637 = vmul.f32 %v741, %v1509
          %v1638 = vmul.f32 %v742, %v1510
          %v1639 = vmul.f32 %v743, %v1511
          %v1640 = vmul.f32 %v744, %v1512
          %v1641 = vmul.f32 %v745, %v1513
          %v1642 = vmul.f32 %v746, %v1514
          %v1643 = vmul.f32 %v747, %v1515
          %v1644 = vmul.f32 %v748, %v1516
          %v1645 = vmul.f32 %v749, %v1517
          %v1646 = vmul.f32 %v750, %v1518
          %v1647 = vmul.f32 %v751, %v1519
          %v1648 = vmul.f32 %v752, %v1520
          %v1649 = vmul.f32 %v753, %v1521
          %v1650 = vmul.f32 %v754, %v1522
          %v1651 = vmul.f32 %v755, %v1523
          %v1652 = vmul.f32 %v756, %v1524
          %v1653 = vmul.f32 %v757, %v1525
          %v1654 = vmul.f32 %v758, %v1526
          %v1655 = vmul.f32 %v759, %v1527
          %v1656 = vmul.f32 %v760, %v1528
          %v1658 = vcombine.high %v434, %v434
          %v1660 = vunpack.c.l.s4 1966171168
          %v1661 = vunpack.c.0.s8 %v1660
          %v1662 = vlaneseq
          %v1663 = vshrl.u32 %v1662, 7
          %v1664 = vsub.s32 %v1661, %v1663
          %v1665 = vrot.slane %v434, %v1664
          %v1667 = vunpack.c.l.s4 1966171168
          %v1668 = vunpack.c.0.s8 %v1667
          %v1669 = vlaneseq
          %v1670 = vshrl.u32 %v1669, 7
          %v1671 = vsub.s32 %v1668, %v1670
          %v1672 = vrot.slane %v1658, %v1671
          %v1673 = vcombine.high %v1665, %v1665
          %v1674 = vcombine.high %v1672, %v1672
          %v1676 = vunpack.c.l.s4 1966171168
          %v1677 = vunpack.c.0.s8 %v1676
          %v1678 = vlaneseq
          %v1679 = vshrl.u32 %v1678, 7
          %v1680 = vsub.s32 %v1677, %v1679
          %v1681 = vrot.slane %v1665, %v1680
          %v1683 = vunpack.c.l.s4 1966171168
          %v1684 = vunpack.c.0.s8 %v1683
          %v1685 = vlaneseq
          %v1686 = vshrl.u32 %v1685, 7
          %v1687 = vsub.s32 %v1684, %v1686
          %v1688 = vrot.slane %v1672, %v1687
          %v1690 = vunpack.c.l.s4 1966171168
          %v1691 = vunpack.c.0.s8 %v1690
          %v1692 = vlaneseq
          %v1693 = vshrl.u32 %v1692, 7
          %v1694 = vsub.s32 %v1691, %v1693
          %v1695 = vrot.slane %v1673, %v1694
          %v1697 = vunpack.c.l.s4 1966171168
          %v1698 = vunpack.c.0.s8 %v1697
          %v1699 = vlaneseq
          %v1700 = vshrl.u32 %v1699, 7
          %v1701 = vsub.s32 %v1698, %v1700
          %v1702 = vrot.slane %v1674, %v1701
          %v1703 = vcombine.high %v1681, %v1681
          %v1704 = vcombine.high %v1688, %v1688
          %v1705 = vcombine.high %v1695, %v1695
          %v1706 = vcombine.high %v1702, %v1702
          %v1707 = vlaneseq
          %v1708 = vshrl.u32 %v1707, 7
          %v1709 = vsub.s32 0, %v1708
          %v1710 = vrot.slane %v1681, %v1709
          %v1711 = vlaneseq
          %v1712 = vshrl.u32 %v1711, 7
          %v1713 = vsub.s32 0, %v1712
          %v1714 = vrot.slane %v1695, %v1713
          %v1715 = vlaneseq
          %v1716 = vshrl.u32 %v1715, 7
          %v1717 = vsub.s32 0, %v1716
          %v1718 = vrot.slane %v1703, %v1717
          %v1719 = vlaneseq
          %v1720 = vshrl.u32 %v1719, 7
          %v1721 = vsub.s32 0, %v1720
          %v1722 = vrot.slane %v1705, %v1721
          %v1723 = vlaneseq
          %v1724 = vshrl.u32 %v1723, 7
          %v1725 = vsub.s32 0, %v1724
          %v1726 = vrot.slane %v1688, %v1725
          %v1727 = vlaneseq
          %v1728 = vshrl.u32 %v1727, 7
          %v1729 = vsub.s32 0, %v1728
          %v1730 = vrot.slane %v1702, %v1729
          %v1731 = vlaneseq
          %v1732 = vshrl.u32 %v1731, 7
          %v1733 = vsub.s32 0, %v1732
          %v1734 = vrot.slane %v1704, %v1733
          %v1735 = vlaneseq
          %v1736 = vshrl.u32 %v1735, 7
          %v1737 = vsub.s32 0, %v1736
          %v1738 = vrot.slane %v1706, %v1737
          %v1747 = vmul.f32 %v1710, %v1529
          %v1748 = vmul.f32 %v1710, %v1530
          %v1749 = vmul.f32 %v1710, %v1531
          %v1750 = vmul.f32 %v1710, %v1532
          %v1751 = vmul.f32 %v1710, %v1533
          %v1752 = vmul.f32 %v1710, %v1534
          %v1753 = vmul.f32 %v1710, %v1535
          %v1754 = vmul.f32 %v1710, %v1536
          %v1755 = vmul.f32 %v1710, %v1537
          %v1756 = vmul.f32 %v1710, %v1538
          %v1757 = vmul.f32 %v1710, %v1539
          %v1758 = vmul.f32 %v1710, %v1540
          %v1759 = vmul.f32 %v1710, %v1541
          %v1760 = vmul.f32 %v1710, %v1542
          %v1761 = vmul.f32 %v1710, %v1543
          %v1762 = vmul.f32 %v1710, %v1544
          %v1763 = vmul.f32 %v1714, %v1545
          %v1764 = vmul.f32 %v1714, %v1546
          %v1765 = vmul.f32 %v1714, %v1547
          %v1766 = vmul.f32 %v1714, %v1548
          %v1767 = vmul.f32 %v1714, %v1549
          %v1768 = vmul.f32 %v1714, %v1550
          %v1769 = vmul.f32 %v1714, %v1551
          %v1770 = vmul.f32 %v1714, %v1552
          %v1771 = vmul.f32 %v1714, %v1553
          %v1772 = vmul.f32 %v1714, %v1554
          %v1773 = vmul.f32 %v1714, %v1555
          %v1774 = vmul.f32 %v1714, %v1556
          %v1775 = vmul.f32 %v1714, %v1557
          %v1776 = vmul.f32 %v1714, %v1558
          %v1777 = vmul.f32 %v1714, %v1559
          %v1778 = vmul.f32 %v1714, %v1560
          %v1779 = vmul.f32 %v1718, %v1561
          %v1780 = vmul.f32 %v1718, %v1562
          %v1781 = vmul.f32 %v1718, %v1563
          %v1782 = vmul.f32 %v1718, %v1564
          %v1783 = vmul.f32 %v1718, %v1565
          %v1784 = vmul.f32 %v1718, %v1566
          %v1785 = vmul.f32 %v1718, %v1567
          %v1786 = vmul.f32 %v1718, %v1568
          %v1787 = vmul.f32 %v1718, %v1569
          %v1788 = vmul.f32 %v1718, %v1570
          %v1789 = vmul.f32 %v1718, %v1571
          %v1790 = vmul.f32 %v1718, %v1572
          %v1791 = vmul.f32 %v1718, %v1573
          %v1792 = vmul.f32 %v1718, %v1574
          %v1793 = vmul.f32 %v1718, %v1575
          %v1794 = vmul.f32 %v1718, %v1576
          %v1795 = vmul.f32 %v1722, %v1577
          %v1796 = vmul.f32 %v1722, %v1578
          %v1797 = vmul.f32 %v1722, %v1579
          %v1798 = vmul.f32 %v1722, %v1580
          %v1799 = vmul.f32 %v1722, %v1581
          %v1800 = vmul.f32 %v1722, %v1582
          %v1801 = vmul.f32 %v1722, %v1583
          %v1802 = vmul.f32 %v1722, %v1584
          %v1803 = vmul.f32 %v1722, %v1585
          %v1804 = vmul.f32 %v1722, %v1586
          %v1805 = vmul.f32 %v1722, %v1587
          %v1806 = vmul.f32 %v1722, %v1588
          %v1807 = vmul.f32 %v1722, %v1589
          %v1808 = vmul.f32 %v1722, %v1590
          %v1809 = vmul.f32 %v1722, %v1591
          %v1810 = vmul.f32 %v1722, %v1592
          %v1811 = vmul.f32 %v1726, %v1593
          %v1812 = vmul.f32 %v1726, %v1594
          %v1813 = vmul.f32 %v1726, %v1595
          %v1814 = vmul.f32 %v1726, %v1596
          %v1815 = vmul.f32 %v1726, %v1597
          %v1816 = vmul.f32 %v1726, %v1598
          %v1817 = vmul.f32 %v1726, %v1599
          %v1818 = vmul.f32 %v1726, %v1600
          %v1819 = vmul.f32 %v1726, %v1601
          %v1820 = vmul.f32 %v1726, %v1602
          %v1821 = vmul.f32 %v1726, %v1603
          %v1822 = vmul.f32 %v1726, %v1604
          %v1823 = vmul.f32 %v1726, %v1605
          %v1824 = vmul.f32 %v1726, %v1606
          %v1825 = vmul.f32 %v1726, %v1607
          %v1826 = vmul.f32 %v1726, %v1608
          %v1827 = vmul.f32 %v1730, %v1609
          %v1828 = vmul.f32 %v1730, %v1610
          %v1829 = vmul.f32 %v1730, %v1611
          %v1830 = vmul.f32 %v1730, %v1612
          %v1831 = vmul.f32 %v1730, %v1613
          %v1832 = vmul.f32 %v1730, %v1614
          %v1833 = vmul.f32 %v1730, %v1615
          %v1834 = vmul.f32 %v1730, %v1616
          %v1835 = vmul.f32 %v1730, %v1617
          %v1836 = vmul.f32 %v1730, %v1618
          %v1837 = vmul.f32 %v1730, %v1619
          %v1838 = vmul.f32 %v1730, %v1620
          %v1839 = vmul.f32 %v1730, %v1621
          %v1840 = vmul.f32 %v1730, %v1622
          %v1841 = vmul.f32 %v1730, %v1623
          %v1842 = vmul.f32 %v1730, %v1624
          %v1843 = vmul.f32 %v1734, %v1625
          %v1844 = vmul.f32 %v1734, %v1626
          %v1845 = vmul.f32 %v1734, %v1627
          %v1846 = vmul.f32 %v1734, %v1628
          %v1847 = vmul.f32 %v1734, %v1629
          %v1848 = vmul.f32 %v1734, %v1630
          %v1849 = vmul.f32 %v1734, %v1631
          %v1850 = vmul.f32 %v1734, %v1632
          %v1851 = vmul.f32 %v1734, %v1633
          %v1852 = vmul.f32 %v1734, %v1634
          %v1853 = vmul.f32 %v1734, %v1635
          %v1854 = vmul.f32 %v1734, %v1636
          %v1855 = vmul.f32 %v1734, %v1637
          %v1856 = vmul.f32 %v1734, %v1638
          %v1857 = vmul.f32 %v1734, %v1639
          %v1858 = vmul.f32 %v1734, %v1640
          %v1859 = vmul.f32 %v1738, %v1641
          %v1860 = vmul.f32 %v1738, %v1642
          %v1861 = vmul.f32 %v1738, %v1643
          %v1862 = vmul.f32 %v1738, %v1644
          %v1863 = vmul.f32 %v1738, %v1645
          %v1864 = vmul.f32 %v1738, %v1646
          %v1865 = vmul.f32 %v1738, %v1647
          %v1866 = vmul.f32 %v1738, %v1648
          %v1867 = vmul.f32 %v1738, %v1649
          %v1868 = vmul.f32 %v1738, %v1650
          %v1869 = vmul.f32 %v1738, %v1651
          %v1870 = vmul.f32 %v1738, %v1652
          %v1871 = vmul.f32 %v1738, %v1653
          %v1872 = vmul.f32 %v1738, %v1654
          %v1873 = vmul.f32 %v1738, %v1655
          %v1874 = vmul.f32 %v1738, %v1656
          %v1875 = vsel %vm421, %v1747, 0.0
          %1876 = vadd.xlane.f32.xlu0 %v1875
          %v1877 = vpop.xlane.xlu0 %1876
          %v1878 = vsel %vm421, %v1748, 0.0
          %1879 = vadd.xlane.f32.xlu0 %v1878
          %v1880 = vpop.xlane.xlu0 %1879
          %v1881 = vsel %vm421, %v1749, 0.0
          %1882 = vadd.xlane.f32.xlu0 %v1881
          %v1883 = vpop.xlane.xlu0 %1882
          %v1884 = vsel %vm421, %v1750, 0.0
          %1885 = vadd.xlane.f32.xlu0 %v1884
          %v1886 = vpop.xlane.xlu0 %1885
          %v1887 = vsel %vm421, %v1751, 0.0
          %1888 = vadd.xlane.f32.xlu0 %v1887
          %v1889 = vpop.xlane.xlu0 %1888
          %v1890 = vsel %vm421, %v1752, 0.0
          %1891 = vadd.xlane.f32.xlu0 %v1890
          %v1892 = vpop.xlane.xlu0 %1891
          %v1893 = vsel %vm421, %v1753, 0.0
          %1894 = vadd.xlane.f32.xlu0 %v1893
          %v1895 = vpop.xlane.xlu0 %1894
          %v1896 = vsel %vm421, %v1754, 0.0
          %1897 = vadd.xlane.f32.xlu0 %v1896
          %v1898 = vpop.xlane.xlu0 %1897
          %v1899 = vsel %vm421, %v1755, 0.0
          %1900 = vadd.xlane.f32.xlu0 %v1899
          %v1901 = vpop.xlane.xlu0 %1900
          %v1902 = vsel %vm421, %v1756, 0.0
          %1903 = vadd.xlane.f32.xlu0 %v1902
          %v1904 = vpop.xlane.xlu0 %1903
          %v1905 = vsel %vm421, %v1757, 0.0
          %1906 = vadd.xlane.f32.xlu0 %v1905
          %v1907 = vpop.xlane.xlu0 %1906
          %v1908 = vsel %vm421, %v1758, 0.0
          %1909 = vadd.xlane.f32.xlu0 %v1908
          %v1910 = vpop.xlane.xlu0 %1909
          %v1911 = vsel %vm421, %v1759, 0.0
          %1912 = vadd.xlane.f32.xlu0 %v1911
          %v1913 = vpop.xlane.xlu0 %1912
          %v1914 = vsel %vm421, %v1760, 0.0
          %1915 = vadd.xlane.f32.xlu0 %v1914
          %v1916 = vpop.xlane.xlu0 %1915
          %v1917 = vsel %vm421, %v1761, 0.0
          %1918 = vadd.xlane.f32.xlu0 %v1917
          %v1919 = vpop.xlane.xlu0 %1918
          %v1920 = vsel %vm421, %v1762, 0.0
          %1921 = vadd.xlane.f32.xlu0 %v1920
          %v1922 = vpop.xlane.xlu0 %1921
          %v1923 = vsel %vm421, %v1763, 0.0
          %1924 = vadd.xlane.f32.xlu0 %v1923
          %v1925 = vpop.xlane.xlu0 %1924
          %v1926 = vsel %vm421, %v1764, 0.0
          %1927 = vadd.xlane.f32.xlu0 %v1926
          %v1928 = vpop.xlane.xlu0 %1927
          %v1929 = vsel %vm421, %v1765, 0.0
          %1930 = vadd.xlane.f32.xlu0 %v1929
          %v1931 = vpop.xlane.xlu0 %1930
          %v1932 = vsel %vm421, %v1766, 0.0
          %1933 = vadd.xlane.f32.xlu0 %v1932
          %v1934 = vpop.xlane.xlu0 %1933
          %v1935 = vsel %vm421, %v1767, 0.0
          %1936 = vadd.xlane.f32.xlu0 %v1935
          %v1937 = vpop.xlane.xlu0 %1936
          %v1938 = vsel %vm421, %v1768, 0.0
          %1939 = vadd.xlane.f32.xlu0 %v1938
          %v1940 = vpop.xlane.xlu0 %1939
          %v1941 = vsel %vm421, %v1769, 0.0
          %1942 = vadd.xlane.f32.xlu0 %v1941
          %v1943 = vpop.xlane.xlu0 %1942
          %v1944 = vsel %vm421, %v1770, 0.0
          %1945 = vadd.xlane.f32.xlu0 %v1944
          %v1946 = vpop.xlane.xlu0 %1945
          %v1947 = vsel %vm421, %v1771, 0.0
          %1948 = vadd.xlane.f32.xlu0 %v1947
          %v1949 = vpop.xlane.xlu0 %1948
          %v1950 = vsel %vm421, %v1772, 0.0
          %1951 = vadd.xlane.f32.xlu0 %v1950
          %v1952 = vpop.xlane.xlu0 %1951
          %v1953 = vsel %vm421, %v1773, 0.0
          %1954 = vadd.xlane.f32.xlu0 %v1953
          %v1955 = vpop.xlane.xlu0 %1954
          %v1956 = vsel %vm421, %v1774, 0.0
          %1957 = vadd.xlane.f32.xlu0 %v1956
          %v1958 = vpop.xlane.xlu0 %1957
          %v1959 = vsel %vm421, %v1775, 0.0
          %1960 = vadd.xlane.f32.xlu0 %v1959
          %v1961 = vpop.xlane.xlu0 %1960
          %v1962 = vsel %vm421, %v1776, 0.0
          %1963 = vadd.xlane.f32.xlu0 %v1962
          %v1964 = vpop.xlane.xlu0 %1963
          %v1965 = vsel %vm421, %v1777, 0.0
          %1966 = vadd.xlane.f32.xlu0 %v1965
          %v1967 = vpop.xlane.xlu0 %1966
          %v1968 = vsel %vm421, %v1778, 0.0
          %1969 = vadd.xlane.f32.xlu0 %v1968
          %v1970 = vpop.xlane.xlu0 %1969
          %v1971 = vsel %vm421, %v1779, 0.0
          %1972 = vadd.xlane.f32.xlu0 %v1971
          %v1973 = vpop.xlane.xlu0 %1972
          %v1974 = vsel %vm421, %v1780, 0.0
          %1975 = vadd.xlane.f32.xlu0 %v1974
          %v1976 = vpop.xlane.xlu0 %1975
          %v1977 = vsel %vm421, %v1781, 0.0
          %1978 = vadd.xlane.f32.xlu0 %v1977
          %v1979 = vpop.xlane.xlu0 %1978
          %v1980 = vsel %vm421, %v1782, 0.0
          %1981 = vadd.xlane.f32.xlu0 %v1980
          %v1982 = vpop.xlane.xlu0 %1981
          %v1983 = vsel %vm421, %v1783, 0.0
          %1984 = vadd.xlane.f32.xlu0 %v1983
          %v1985 = vpop.xlane.xlu0 %1984
          %v1986 = vsel %vm421, %v1784, 0.0
          %1987 = vadd.xlane.f32.xlu0 %v1986
          %v1988 = vpop.xlane.xlu0 %1987
          %v1989 = vsel %vm421, %v1785, 0.0
          %1990 = vadd.xlane.f32.xlu0 %v1989
          %v1991 = vpop.xlane.xlu0 %1990
          %v1992 = vsel %vm421, %v1786, 0.0
          %1993 = vadd.xlane.f32.xlu0 %v1992
          %v1994 = vpop.xlane.xlu0 %1993
          %v1995 = vsel %vm421, %v1787, 0.0
          %1996 = vadd.xlane.f32.xlu0 %v1995
          %v1997 = vpop.xlane.xlu0 %1996
          %v1998 = vsel %vm421, %v1788, 0.0
          %1999 = vadd.xlane.f32.xlu0 %v1998
          %v2000 = vpop.xlane.xlu0 %1999
          %v2001 = vsel %vm421, %v1789, 0.0
          %2002 = vadd.xlane.f32.xlu0 %v2001
          %v2003 = vpop.xlane.xlu0 %2002
          %v2004 = vsel %vm421, %v1790, 0.0
          %2005 = vadd.xlane.f32.xlu0 %v2004
          %v2006 = vpop.xlane.xlu0 %2005
          %v2007 = vsel %vm421, %v1791, 0.0
          %2008 = vadd.xlane.f32.xlu0 %v2007
          %v2009 = vpop.xlane.xlu0 %2008
          %v2010 = vsel %vm421, %v1792, 0.0
          %2011 = vadd.xlane.f32.xlu0 %v2010
          %v2012 = vpop.xlane.xlu0 %2011
          %v2013 = vsel %vm421, %v1793, 0.0
          %2014 = vadd.xlane.f32.xlu0 %v2013
          %v2015 = vpop.xlane.xlu0 %2014
          %v2016 = vsel %vm421, %v1794, 0.0
          %2017 = vadd.xlane.f32.xlu0 %v2016
          %v2018 = vpop.xlane.xlu0 %2017
          %v2019 = vsel %vm421, %v1795, 0.0
          %2020 = vadd.xlane.f32.xlu0 %v2019
          %v2021 = vpop.xlane.xlu0 %2020
          %v2022 = vsel %vm421, %v1796, 0.0
          %2023 = vadd.xlane.f32.xlu0 %v2022
          %v2024 = vpop.xlane.xlu0 %2023
          %v2025 = vsel %vm421, %v1797, 0.0
          %2026 = vadd.xlane.f32.xlu0 %v2025
          %v2027 = vpop.xlane.xlu0 %2026
          %v2028 = vsel %vm421, %v1798, 0.0
          %2029 = vadd.xlane.f32.xlu0 %v2028
          %v2030 = vpop.xlane.xlu0 %2029
          %v2031 = vsel %vm421, %v1799, 0.0
          %2032 = vadd.xlane.f32.xlu0 %v2031
          %v2033 = vpop.xlane.xlu0 %2032
          %v2034 = vsel %vm421, %v1800, 0.0
          %2035 = vadd.xlane.f32.xlu0 %v2034
          %v2036 = vpop.xlane.xlu0 %2035
          %v2037 = vsel %vm421, %v1801, 0.0
          %2038 = vadd.xlane.f32.xlu0 %v2037
          %v2039 = vpop.xlane.xlu0 %2038
          %v2040 = vsel %vm421, %v1802, 0.0
          %2041 = vadd.xlane.f32.xlu0 %v2040
          %v2042 = vpop.xlane.xlu0 %2041
          %v2043 = vsel %vm421, %v1803, 0.0
          %2044 = vadd.xlane.f32.xlu0 %v2043
          %v2045 = vpop.xlane.xlu0 %2044
          %v2046 = vsel %vm421, %v1804, 0.0
          %2047 = vadd.xlane.f32.xlu0 %v2046
          %v2048 = vpop.xlane.xlu0 %2047
          %v2049 = vsel %vm421, %v1805, 0.0
          %2050 = vadd.xlane.f32.xlu0 %v2049
          %v2051 = vpop.xlane.xlu0 %2050
          %v2052 = vsel %vm421, %v1806, 0.0
          %2053 = vadd.xlane.f32.xlu0 %v2052
          %v2054 = vpop.xlane.xlu0 %2053
          %v2055 = vsel %vm421, %v1807, 0.0
          %2056 = vadd.xlane.f32.xlu0 %v2055
          %v2057 = vpop.xlane.xlu0 %2056
          %v2058 = vsel %vm421, %v1808, 0.0
          %2059 = vadd.xlane.f32.xlu0 %v2058
          %v2060 = vpop.xlane.xlu0 %2059
          %v2061 = vsel %vm421, %v1809, 0.0
          %2062 = vadd.xlane.f32.xlu0 %v2061
          %v2063 = vpop.xlane.xlu0 %2062
          %v2064 = vsel %vm421, %v1810, 0.0
          %2065 = vadd.xlane.f32.xlu0 %v2064
          %v2066 = vpop.xlane.xlu0 %2065
          %v2067 = vsel %vm421, %v1811, 0.0
          %2068 = vadd.xlane.f32.xlu0 %v2067
          %v2069 = vpop.xlane.xlu0 %2068
          %v2070 = vsel %vm421, %v1812, 0.0
          %2071 = vadd.xlane.f32.xlu0 %v2070
          %v2072 = vpop.xlane.xlu0 %2071
          %v2073 = vsel %vm421, %v1813, 0.0
          %2074 = vadd.xlane.f32.xlu0 %v2073
          %v2075 = vpop.xlane.xlu0 %2074
          %v2076 = vsel %vm421, %v1814, 0.0
          %2077 = vadd.xlane.f32.xlu0 %v2076
          %v2078 = vpop.xlane.xlu0 %2077
          %v2079 = vsel %vm421, %v1815, 0.0
          %2080 = vadd.xlane.f32.xlu0 %v2079
          %v2081 = vpop.xlane.xlu0 %2080
          %v2082 = vsel %vm421, %v1816, 0.0
          %2083 = vadd.xlane.f32.xlu0 %v2082
          %v2084 = vpop.xlane.xlu0 %2083
          %v2085 = vsel %vm421, %v1817, 0.0
          %2086 = vadd.xlane.f32.xlu0 %v2085
          %v2087 = vpop.xlane.xlu0 %2086
          %v2088 = vsel %vm421, %v1818, 0.0
          %2089 = vadd.xlane.f32.xlu0 %v2088
          %v2090 = vpop.xlane.xlu0 %2089
          %v2091 = vsel %vm421, %v1819, 0.0
          %2092 = vadd.xlane.f32.xlu0 %v2091
          %v2093 = vpop.xlane.xlu0 %2092
          %v2094 = vsel %vm421, %v1820, 0.0
          %2095 = vadd.xlane.f32.xlu0 %v2094
          %v2096 = vpop.xlane.xlu0 %2095
          %v2097 = vsel %vm421, %v1821, 0.0
          %2098 = vadd.xlane.f32.xlu0 %v2097
          %v2099 = vpop.xlane.xlu0 %2098
          %v2100 = vsel %vm421, %v1822, 0.0
          %2101 = vadd.xlane.f32.xlu0 %v2100
          %v2102 = vpop.xlane.xlu0 %2101
          %v2103 = vsel %vm421, %v1823, 0.0
          %2104 = vadd.xlane.f32.xlu0 %v2103
          %v2105 = vpop.xlane.xlu0 %2104
          %v2106 = vsel %vm421, %v1824, 0.0
          %2107 = vadd.xlane.f32.xlu0 %v2106
          %v2108 = vpop.xlane.xlu0 %2107
          %v2109 = vsel %vm421, %v1825, 0.0
          %2110 = vadd.xlane.f32.xlu0 %v2109
          %v2111 = vpop.xlane.xlu0 %2110
          %v2112 = vsel %vm421, %v1826, 0.0
          %2113 = vadd.xlane.f32.xlu0 %v2112
          %v2114 = vpop.xlane.xlu0 %2113
          %v2115 = vsel %vm421, %v1827, 0.0
          %2116 = vadd.xlane.f32.xlu0 %v2115
          %v2117 = vpop.xlane.xlu0 %2116
          %v2118 = vsel %vm421, %v1828, 0.0
          %2119 = vadd.xlane.f32.xlu0 %v2118
          %v2120 = vpop.xlane.xlu0 %2119
          %v2121 = vsel %vm421, %v1829, 0.0
          %2122 = vadd.xlane.f32.xlu0 %v2121
          %v2123 = vpop.xlane.xlu0 %2122
          %v2124 = vsel %vm421, %v1830, 0.0
          %2125 = vadd.xlane.f32.xlu0 %v2124
          %v2126 = vpop.xlane.xlu0 %2125
          %v2127 = vsel %vm421, %v1831, 0.0
          %2128 = vadd.xlane.f32.xlu0 %v2127
          %v2129 = vpop.xlane.xlu0 %2128
          %v2130 = vsel %vm421, %v1832, 0.0
          %2131 = vadd.xlane.f32.xlu0 %v2130
          %v2132 = vpop.xlane.xlu0 %2131
          %v2133 = vsel %vm421, %v1833, 0.0
          %2134 = vadd.xlane.f32.xlu0 %v2133
          %v2135 = vpop.xlane.xlu0 %2134
          %v2136 = vsel %vm421, %v1834, 0.0
          %2137 = vadd.xlane.f32.xlu0 %v2136
          %v2138 = vpop.xlane.xlu0 %2137
          %v2139 = vsel %vm421, %v1835, 0.0
          %2140 = vadd.xlane.f32.xlu0 %v2139
          %v2141 = vpop.xlane.xlu0 %2140
          %v2142 = vsel %vm421, %v1836, 0.0
          %2143 = vadd.xlane.f32.xlu0 %v2142
          %v2144 = vpop.xlane.xlu0 %2143
          %v2145 = vsel %vm421, %v1837, 0.0
          %2146 = vadd.xlane.f32.xlu0 %v2145
          %v2147 = vpop.xlane.xlu0 %2146
          %v2148 = vsel %vm421, %v1838, 0.0
          %2149 = vadd.xlane.f32.xlu0 %v2148
          %v2150 = vpop.xlane.xlu0 %2149
          %v2151 = vsel %vm421, %v1839, 0.0
          %2152 = vadd.xlane.f32.xlu0 %v2151
          %v2153 = vpop.xlane.xlu0 %2152
          %v2154 = vsel %vm421, %v1840, 0.0
          %2155 = vadd.xlane.f32.xlu0 %v2154
          %v2156 = vpop.xlane.xlu0 %2155
          %v2157 = vsel %vm421, %v1841, 0.0
          %2158 = vadd.xlane.f32.xlu0 %v2157
          %v2159 = vpop.xlane.xlu0 %2158
          %v2160 = vsel %vm421, %v1842, 0.0
          %2161 = vadd.xlane.f32.xlu0 %v2160
          %v2162 = vpop.xlane.xlu0 %2161
          %v2163 = vsel %vm421, %v1843, 0.0
          %2164 = vadd.xlane.f32.xlu0 %v2163
          %v2165 = vpop.xlane.xlu0 %2164
          %v2166 = vsel %vm421, %v1844, 0.0
          %2167 = vadd.xlane.f32.xlu0 %v2166
          %v2168 = vpop.xlane.xlu0 %2167
          %v2169 = vsel %vm421, %v1845, 0.0
          %2170 = vadd.xlane.f32.xlu0 %v2169
          %v2171 = vpop.xlane.xlu0 %2170
          %v2172 = vsel %vm421, %v1846, 0.0
          %2173 = vadd.xlane.f32.xlu0 %v2172
          %v2174 = vpop.xlane.xlu0 %2173
          %v2175 = vsel %vm421, %v1847, 0.0
          %2176 = vadd.xlane.f32.xlu0 %v2175
          %v2177 = vpop.xlane.xlu0 %2176
          %v2178 = vsel %vm421, %v1848, 0.0
          %2179 = vadd.xlane.f32.xlu0 %v2178
          %v2180 = vpop.xlane.xlu0 %2179
          %v2181 = vsel %vm421, %v1849, 0.0
          %2182 = vadd.xlane.f32.xlu0 %v2181
          %v2183 = vpop.xlane.xlu0 %2182
          %v2184 = vsel %vm421, %v1850, 0.0
          %2185 = vadd.xlane.f32.xlu0 %v2184
          %v2186 = vpop.xlane.xlu0 %2185
          %v2187 = vsel %vm421, %v1851, 0.0
          %2188 = vadd.xlane.f32.xlu0 %v2187
          %v2189 = vpop.xlane.xlu0 %2188
          %v2190 = vsel %vm421, %v1852, 0.0
          %2191 = vadd.xlane.f32.xlu0 %v2190
          %v2192 = vpop.xlane.xlu0 %2191
          %v2193 = vsel %vm421, %v1853, 0.0
          %2194 = vadd.xlane.f32.xlu0 %v2193
          %v2195 = vpop.xlane.xlu0 %2194
          %v2196 = vsel %vm421, %v1854, 0.0
          %2197 = vadd.xlane.f32.xlu0 %v2196
          %v2198 = vpop.xlane.xlu0 %2197
          %v2199 = vsel %vm421, %v1855, 0.0
          %2200 = vadd.xlane.f32.xlu0 %v2199
          %v2201 = vpop.xlane.xlu0 %2200
          %v2202 = vsel %vm421, %v1856, 0.0
          %2203 = vadd.xlane.f32.xlu0 %v2202
          %v2204 = vpop.xlane.xlu0 %2203
          %v2205 = vsel %vm421, %v1857, 0.0
          %2206 = vadd.xlane.f32.xlu0 %v2205
          %v2207 = vpop.xlane.xlu0 %2206
          %v2208 = vsel %vm421, %v1858, 0.0
          %2209 = vadd.xlane.f32.xlu0 %v2208
          %v2210 = vpop.xlane.xlu0 %2209
          %v2211 = vsel %vm421, %v1859, 0.0
          %2212 = vadd.xlane.f32.xlu0 %v2211
          %v2213 = vpop.xlane.xlu0 %2212
          %v2214 = vsel %vm421, %v1860, 0.0
          %2215 = vadd.xlane.f32.xlu0 %v2214
          %v2216 = vpop.xlane.xlu0 %2215
          %v2217 = vsel %vm421, %v1861, 0.0
          %2218 = vadd.xlane.f32.xlu0 %v2217
          %v2219 = vpop.xlane.xlu0 %2218
          %v2220 = vsel %vm421, %v1862, 0.0
          %2221 = vadd.xlane.f32.xlu0 %v2220
          %v2222 = vpop.xlane.xlu0 %2221
          %v2223 = vsel %vm421, %v1863, 0.0
          %2224 = vadd.xlane.f32.xlu0 %v2223
          %v2225 = vpop.xlane.xlu0 %2224
          %v2226 = vsel %vm421, %v1864, 0.0
          %2227 = vadd.xlane.f32.xlu0 %v2226
          %v2228 = vpop.xlane.xlu0 %2227
          %v2229 = vsel %vm421, %v1865, 0.0
          %2230 = vadd.xlane.f32.xlu0 %v2229
          %v2231 = vpop.xlane.xlu0 %2230
          %v2232 = vsel %vm421, %v1866, 0.0
          %2233 = vadd.xlane.f32.xlu0 %v2232
          %v2234 = vpop.xlane.xlu0 %2233
          %v2235 = vsel %vm421, %v1867, 0.0
          %2236 = vadd.xlane.f32.xlu0 %v2235
          %v2237 = vpop.xlane.xlu0 %2236
          %v2238 = vsel %vm421, %v1868, 0.0
          %2239 = vadd.xlane.f32.xlu0 %v2238
          %v2240 = vpop.xlane.xlu0 %2239
          %v2241 = vsel %vm421, %v1869, 0.0
          %2242 = vadd.xlane.f32.xlu0 %v2241
          %v2243 = vpop.xlane.xlu0 %2242
          %v2244 = vsel %vm421, %v1870, 0.0
          %2245 = vadd.xlane.f32.xlu0 %v2244
          %v2246 = vpop.xlane.xlu0 %2245
          %v2247 = vsel %vm421, %v1871, 0.0
          %2248 = vadd.xlane.f32.xlu0 %v2247
          %v2249 = vpop.xlane.xlu0 %2248
          %v2250 = vsel %vm421, %v1872, 0.0
          %2251 = vadd.xlane.f32.xlu0 %v2250
          %v2252 = vpop.xlane.xlu0 %2251
          %v2253 = vsel %vm421, %v1873, 0.0
          %2254 = vadd.xlane.f32.xlu0 %v2253
          %v2255 = vpop.xlane.xlu0 %2254
          %v2256 = vsel %vm421, %v1874, 0.0
          %2257 = vadd.xlane.f32.xlu0 %v2256
          %v2258 = vpop.xlane.xlu0 %2257
          %s2259 = sld [smem:[#allocation3]]
          %v2260 = vstv %s2259
          %v2261 = vmul.f32 %v2260, %v1877
          %v2262 = vmul.f32 %v2260, %v1880
          %v2263 = vmul.f32 %v2260, %v1883
          %v2264 = vmul.f32 %v2260, %v1886
          %v2265 = vmul.f32 %v2260, %v1889
          %v2266 = vmul.f32 %v2260, %v1892
          %v2267 = vmul.f32 %v2260, %v1895
          %v2268 = vmul.f32 %v2260, %v1898
          %v2269 = vmul.f32 %v2260, %v1901
          %v2270 = vmul.f32 %v2260, %v1904
          %v2271 = vmul.f32 %v2260, %v1907
          %v2272 = vmul.f32 %v2260, %v1910
          %v2273 = vmul.f32 %v2260, %v1913
          %v2274 = vmul.f32 %v2260, %v1916
          %v2275 = vmul.f32 %v2260, %v1919
          %v2276 = vmul.f32 %v2260, %v1922
          %v2277 = vmul.f32 %v2260, %v1925
          %v2278 = vmul.f32 %v2260, %v1928
          %v2279 = vmul.f32 %v2260, %v1931
          %v2280 = vmul.f32 %v2260, %v1934
          %v2281 = vmul.f32 %v2260, %v1937
          %v2282 = vmul.f32 %v2260, %v1940
          %v2283 = vmul.f32 %v2260, %v1943
          %v2284 = vmul.f32 %v2260, %v1946
          %v2285 = vmul.f32 %v2260, %v1949
          %v2286 = vmul.f32 %v2260, %v1952
          %v2287 = vmul.f32 %v2260, %v1955
          %v2288 = vmul.f32 %v2260, %v1958
          %v2289 = vmul.f32 %v2260, %v1961
          %v2290 = vmul.f32 %v2260, %v1964
          %v2291 = vmul.f32 %v2260, %v1967
          %v2292 = vmul.f32 %v2260, %v1970
          %v2293 = vmul.f32 %v2260, %v1973
          %v2294 = vmul.f32 %v2260, %v1976
          %v2295 = vmul.f32 %v2260, %v1979
          %v2296 = vmul.f32 %v2260, %v1982
          %v2297 = vmul.f32 %v2260, %v1985
          %v2298 = vmul.f32 %v2260, %v1988
          %v2299 = vmul.f32 %v2260, %v1991
          %v2300 = vmul.f32 %v2260, %v1994
          %v2301 = vmul.f32 %v2260, %v1997
          %v2302 = vmul.f32 %v2260, %v2000
          %v2303 = vmul.f32 %v2260, %v2003
          %v2304 = vmul.f32 %v2260, %v2006
          %v2305 = vmul.f32 %v2260, %v2009
          %v2306 = vmul.f32 %v2260, %v2012
          %v2307 = vmul.f32 %v2260, %v2015
          %v2308 = vmul.f32 %v2260, %v2018
          %v2309 = vmul.f32 %v2260, %v2021
          %v2310 = vmul.f32 %v2260, %v2024
          %v2311 = vmul.f32 %v2260, %v2027
          %v2312 = vmul.f32 %v2260, %v2030
          %v2313 = vmul.f32 %v2260, %v2033
          %v2314 = vmul.f32 %v2260, %v2036
          %v2315 = vmul.f32 %v2260, %v2039
          %v2316 = vmul.f32 %v2260, %v2042
          %v2317 = vmul.f32 %v2260, %v2045
          %v2318 = vmul.f32 %v2260, %v2048
          %v2319 = vmul.f32 %v2260, %v2051
          %v2320 = vmul.f32 %v2260, %v2054
          %v2321 = vmul.f32 %v2260, %v2057
          %v2322 = vmul.f32 %v2260, %v2060
          %v2323 = vmul.f32 %v2260, %v2063
          %v2324 = vmul.f32 %v2260, %v2066
          %v2325 = vmul.f32 %v2260, %v2069
          %v2326 = vmul.f32 %v2260, %v2072
          %v2327 = vmul.f32 %v2260, %v2075
          %v2328 = vmul.f32 %v2260, %v2078
          %v2329 = vmul.f32 %v2260, %v2081
          %v2330 = vmul.f32 %v2260, %v2084
          %v2331 = vmul.f32 %v2260, %v2087
          %v2332 = vmul.f32 %v2260, %v2090
          %v2333 = vmul.f32 %v2260, %v2093
          %v2334 = vmul.f32 %v2260, %v2096
          %v2335 = vmul.f32 %v2260, %v2099
          %v2336 = vmul.f32 %v2260, %v2102
          %v2337 = vmul.f32 %v2260, %v2105
          %v2338 = vmul.f32 %v2260, %v2108
          %v2339 = vmul.f32 %v2260, %v2111
          %v2340 = vmul.f32 %v2260, %v2114
          %v2341 = vmul.f32 %v2260, %v2117
          %v2342 = vmul.f32 %v2260, %v2120
          %v2343 = vmul.f32 %v2260, %v2123
          %v2344 = vmul.f32 %v2260, %v2126
          %v2345 = vmul.f32 %v2260, %v2129
          %v2346 = vmul.f32 %v2260, %v2132
          %v2347 = vmul.f32 %v2260, %v2135
          %v2348 = vmul.f32 %v2260, %v2138
          %v2349 = vmul.f32 %v2260, %v2141
          %v2350 = vmul.f32 %v2260, %v2144
          %v2351 = vmul.f32 %v2260, %v2147
          %v2352 = vmul.f32 %v2260, %v2150
          %v2353 = vmul.f32 %v2260, %v2153
          %v2354 = vmul.f32 %v2260, %v2156
          %v2355 = vmul.f32 %v2260, %v2159
          %v2356 = vmul.f32 %v2260, %v2162
          %v2357 = vmul.f32 %v2260, %v2165
          %v2358 = vmul.f32 %v2260, %v2168
          %v2359 = vmul.f32 %v2260, %v2171
          %v2360 = vmul.f32 %v2260, %v2174
          %v2361 = vmul.f32 %v2260, %v2177
          %v2362 = vmul.f32 %v2260, %v2180
          %v2363 = vmul.f32 %v2260, %v2183
          %v2364 = vmul.f32 %v2260, %v2186
          %v2365 = vmul.f32 %v2260, %v2189
          %v2366 = vmul.f32 %v2260, %v2192
          %v2367 = vmul.f32 %v2260, %v2195
          %v2368 = vmul.f32 %v2260, %v2198
          %v2369 = vmul.f32 %v2260, %v2201
          %v2370 = vmul.f32 %v2260, %v2204
          %v2371 = vmul.f32 %v2260, %v2207
          %v2372 = vmul.f32 %v2260, %v2210
          %v2373 = vmul.f32 %v2260, %v2213
          %v2374 = vmul.f32 %v2260, %v2216
          %v2375 = vmul.f32 %v2260, %v2219
          %v2376 = vmul.f32 %v2260, %v2222
          %v2377 = vmul.f32 %v2260, %v2225
          %v2378 = vmul.f32 %v2260, %v2228
          %v2379 = vmul.f32 %v2260, %v2231
          %v2380 = vmul.f32 %v2260, %v2234
          %v2381 = vmul.f32 %v2260, %v2237
          %v2382 = vmul.f32 %v2260, %v2240
          %v2383 = vmul.f32 %v2260, %v2243
          %v2384 = vmul.f32 %v2260, %v2246
          %v2385 = vmul.f32 %v2260, %v2249
          %v2386 = vmul.f32 %v2260, %v2252
          %v2387 = vmul.f32 %v2260, %v2255
          %v2388 = vmul.f32 %v2260, %v2258
          %v2517 = vlaneseq
          %v2518 = vand.u32 %v2517, 127
          %v2519 = vlaneseq
          %v2520 = vshrl.u32 %v2519, 7
          %v2521 = vsub.s32 %v2518, %v2520
          %v2522 = vrot.slane %v2261, %v2521
          %v2523 = vadd.s32 %v2518, 4294967288
          %v2524 = vlaneseq
          %v2525 = vshrl.u32 %v2524, 7
          %v2526 = vsub.s32 %v2523, %v2525
          %v2527 = vrot.slane %v2262, %v2526
          %vm2528 = vcmask 130112
          %v2529 = vsel %vm2528, %v2527, %v2522
          %v2530 = vadd.s32 %v2518, 4294967280
          %v2531 = vlaneseq
          %v2532 = vshrl.u32 %v2531, 7
          %v2533 = vsub.s32 %v2530, %v2532
          %v2534 = vrot.slane %v2263, %v2533
          %vm2535 = vcmask 195712
          %v2536 = vsel %vm2535, %v2534, %v2529
          %v2537 = vadd.s32 %v2518, 4294967272
          %v2538 = vlaneseq
          %v2539 = vshrl.u32 %v2538, 7
          %v2540 = vsub.s32 %v2537, %v2539
          %v2541 = vrot.slane %v2264, %v2540
          %vm2542 = vcmask 261312
          %v2543 = vsel %vm2542, %v2541, %v2536
          %v2544 = vadd.s32 %v2518, 4294967264
          %v2545 = vlaneseq
          %v2546 = vshrl.u32 %v2545, 7
          %v2547 = vsub.s32 %v2544, %v2546
          %v2548 = vrot.slane %v2265, %v2547
          %vm2549 = vcmask 326912
          %v2550 = vsel %vm2549, %v2548, %v2543
          %v2551 = vadd.s32 %v2518, 4294967256
          %v2552 = vlaneseq
          %v2553 = vshrl.u32 %v2552, 7
          %v2554 = vsub.s32 %v2551, %v2553
          %v2555 = vrot.slane %v2266, %v2554
          %vm2556 = vcmask 392512
          %v2557 = vsel %vm2556, %v2555, %v2550
          %v2558 = vadd.s32 %v2518, 4294967248
          %v2559 = vlaneseq
          %v2560 = vshrl.u32 %v2559, 7
          %v2561 = vsub.s32 %v2558, %v2560
          %v2562 = vrot.slane %v2267, %v2561
          %vm2563 = vcmask 458112
          %v2564 = vsel %vm2563, %v2562, %v2557
          %v2565 = vadd.s32 %v2518, 4294967240
          %v2566 = vlaneseq
          %v2567 = vshrl.u32 %v2566, 7
          %v2568 = vsub.s32 %v2565, %v2567
          %v2569 = vrot.slane %v2268, %v2568
          %vm2570 = vcmask 523712
          %v2571 = vsel %vm2570, %v2569, %v2564
          %v2572 = vadd.s32 %v2518, 4294967232
          %v2573 = vlaneseq
          %v2574 = vshrl.u32 %v2573, 7
          %v2575 = vsub.s32 %v2572, %v2574
          %v2576 = vrot.slane %v2269, %v2575
          %vm2577 = vcmask 589312
          %v2578 = vsel %vm2577, %v2576, %v2571
          %v2579 = vadd.s32 %v2518, 4294967224
          %v2580 = vlaneseq
          %v2581 = vshrl.u32 %v2580, 7
          %v2582 = vsub.s32 %v2579, %v2581
          %v2583 = vrot.slane %v2270, %v2582
          %vm2584 = vcmask 654912
          %v2585 = vsel %vm2584, %v2583, %v2578
          %v2586 = vadd.s32 %v2518, 4294967216
          %v2587 = vlaneseq
          %v2588 = vshrl.u32 %v2587, 7
          %v2589 = vsub.s32 %v2586, %v2588
          %v2590 = vrot.slane %v2271, %v2589
          %vm2591 = vcmask 720512
          %v2592 = vsel %vm2591, %v2590, %v2585
          %v2593 = vadd.s32 %v2518, 4294967208
          %v2594 = vlaneseq
          %v2595 = vshrl.u32 %v2594, 7
          %v2596 = vsub.s32 %v2593, %v2595
          %v2597 = vrot.slane %v2272, %v2596
          %vm2598 = vcmask 786112
          %v2599 = vsel %vm2598, %v2597, %v2592
          %v2600 = vadd.s32 %v2518, 4294967200
          %v2601 = vlaneseq
          %v2602 = vshrl.u32 %v2601, 7
          %v2603 = vsub.s32 %v2600, %v2602
          %v2604 = vrot.slane %v2273, %v2603
          %vm2605 = vcmask 851712
          %v2606 = vsel %vm2605, %v2604, %v2599
          %v2607 = vadd.s32 %v2518, 4294967192
          %v2608 = vlaneseq
          %v2609 = vshrl.u32 %v2608, 7
          %v2610 = vsub.s32 %v2607, %v2609
          %v2611 = vrot.slane %v2274, %v2610
          %vm2612 = vcmask 917312
          %v2613 = vsel %vm2612, %v2611, %v2606
          %v2614 = vadd.s32 %v2518, 4294967184
          %v2615 = vlaneseq
          %v2616 = vshrl.u32 %v2615, 7
          %v2617 = vsub.s32 %v2614, %v2616
          %v2618 = vrot.slane %v2275, %v2617
          %vm2619 = vcmask 982912
          %v2620 = vsel %vm2619, %v2618, %v2613
          %v2621 = vadd.s32 %v2518, 4294967176
          %v2622 = vlaneseq
          %v2623 = vshrl.u32 %v2622, 7
          %v2624 = vsub.s32 %v2621, %v2623
          %v2625 = vrot.slane %v2276, %v2624
          %vm2626 = vcmask 1048512
          %v2627 = vsel %vm2626, %v2625, %v2620
          %v2628 = vlaneseq
          %v2629 = vshrl.u32 %v2628, 7
          %v2630 = vsub.s32 %v2518, %v2629
          %v2631 = vrot.slane %v2277, %v2630
          %v2632 = vlaneseq
          %v2633 = vshrl.u32 %v2632, 7
          %v2634 = vsub.s32 %v2523, %v2633
          %v2635 = vrot.slane %v2278, %v2634
          %v2636 = vsel %vm2528, %v2635, %v2631
          %v2637 = vlaneseq
          %v2638 = vshrl.u32 %v2637, 7
          %v2639 = vsub.s32 %v2530, %v2638
          %v2640 = vrot.slane %v2279, %v2639
          %v2641 = vsel %vm2535, %v2640, %v2636
          %v2642 = vlaneseq
          %v2643 = vshrl.u32 %v2642, 7
          %v2644 = vsub.s32 %v2537, %v2643
          %v2645 = vrot.slane %v2280, %v2644
          %v2646 = vsel %vm2542, %v2645, %v2641
          %v2647 = vlaneseq
          %v2648 = vshrl.u32 %v2647, 7
          %v2649 = vsub.s32 %v2544, %v2648
          %v2650 = vrot.slane %v2281, %v2649
          %v2651 = vsel %vm2549, %v2650, %v2646
          %v2652 = vlaneseq
          %v2653 = vshrl.u32 %v2652, 7
          %v2654 = vsub.s32 %v2551, %v2653
          %v2655 = vrot.slane %v2282, %v2654
          %v2656 = vsel %vm2556, %v2655, %v2651
          %v2657 = vlaneseq
          %v2658 = vshrl.u32 %v2657, 7
          %v2659 = vsub.s32 %v2558, %v2658
          %v2660 = vrot.slane %v2283, %v2659
          %v2661 = vsel %vm2563, %v2660, %v2656
          %v2662 = vlaneseq
          %v2663 = vshrl.u32 %v2662, 7
          %v2664 = vsub.s32 %v2565, %v2663
          %v2665 = vrot.slane %v2284, %v2664
          %v2666 = vsel %vm2570, %v2665, %v2661
          %v2667 = vlaneseq
          %v2668 = vshrl.u32 %v2667, 7
          %v2669 = vsub.s32 %v2572, %v2668
          %v2670 = vrot.slane %v2285, %v2669
          %v2671 = vsel %vm2577, %v2670, %v2666
          %v2672 = vlaneseq
          %v2673 = vshrl.u32 %v2672, 7
          %v2674 = vsub.s32 %v2579, %v2673
          %v2675 = vrot.slane %v2286, %v2674
          %v2676 = vsel %vm2584, %v2675, %v2671
          %v2677 = vlaneseq
          %v2678 = vshrl.u32 %v2677, 7
          %v2679 = vsub.s32 %v2586, %v2678
          %v2680 = vrot.slane %v2287, %v2679
          %v2681 = vsel %vm2591, %v2680, %v2676
          %v2682 = vlaneseq
          %v2683 = vshrl.u32 %v2682, 7
          %v2684 = vsub.s32 %v2593, %v2683
          %v2685 = vrot.slane %v2288, %v2684
          %v2686 = vsel %vm2598, %v2685, %v2681
          %v2687 = vlaneseq
          %v2688 = vshrl.u32 %v2687, 7
          %v2689 = vsub.s32 %v2600, %v2688
          %v2690 = vrot.slane %v2289, %v2689
          %v2691 = vsel %vm2605, %v2690, %v2686
          %v2692 = vlaneseq
          %v2693 = vshrl.u32 %v2692, 7
          %v2694 = vsub.s32 %v2607, %v2693
          %v2695 = vrot.slane %v2290, %v2694
          %v2696 = vsel %vm2612, %v2695, %v2691
          %v2697 = vlaneseq
          %v2698 = vshrl.u32 %v2697, 7
          %v2699 = vsub.s32 %v2614, %v2698
          %v2700 = vrot.slane %v2291, %v2699
          %v2701 = vsel %vm2619, %v2700, %v2696
          %v2702 = vlaneseq
          %v2703 = vshrl.u32 %v2702, 7
          %v2704 = vsub.s32 %v2621, %v2703
          %v2705 = vrot.slane %v2292, %v2704
          %v2706 = vsel %vm2626, %v2705, %v2701
          %v2707 = vlaneseq
          %v2708 = vshrl.u32 %v2707, 7
          %v2709 = vsub.s32 %v2518, %v2708
          %v2710 = vrot.slane %v2293, %v2709
          %v2711 = vlaneseq
          %v2712 = vshrl.u32 %v2711, 7
          %v2713 = vsub.s32 %v2523, %v2712
          %v2714 = vrot.slane %v2294, %v2713
          %v2715 = vsel %vm2528, %v2714, %v2710
          %v2716 = vlaneseq
          %v2717 = vshrl.u32 %v2716, 7
          %v2718 = vsub.s32 %v2530, %v2717
          %v2719 = vrot.slane %v2295, %v2718
          %v2720 = vsel %vm2535, %v2719, %v2715
          %v2721 = vlaneseq
          %v2722 = vshrl.u32 %v2721, 7
          %v2723 = vsub.s32 %v2537, %v2722
          %v2724 = vrot.slane %v2296, %v2723
          %v2725 = vsel %vm2542, %v2724, %v2720
          %v2726 = vlaneseq
          %v2727 = vshrl.u32 %v2726, 7
          %v2728 = vsub.s32 %v2544, %v2727
          %v2729 = vrot.slane %v2297, %v2728
          %v2730 = vsel %vm2549, %v2729, %v2725
          %v2731 = vlaneseq
          %v2732 = vshrl.u32 %v2731, 7
          %v2733 = vsub.s32 %v2551, %v2732
          %v2734 = vrot.slane %v2298, %v2733
          %v2735 = vsel %vm2556, %v2734, %v2730
          %v2736 = vlaneseq
          %v2737 = vshrl.u32 %v2736, 7
          %v2738 = vsub.s32 %v2558, %v2737
          %v2739 = vrot.slane %v2299, %v2738
          %v2740 = vsel %vm2563, %v2739, %v2735
          %v2741 = vlaneseq
          %v2742 = vshrl.u32 %v2741, 7
          %v2743 = vsub.s32 %v2565, %v2742
          %v2744 = vrot.slane %v2300, %v2743
          %v2745 = vsel %vm2570, %v2744, %v2740
          %v2746 = vlaneseq
          %v2747 = vshrl.u32 %v2746, 7
          %v2748 = vsub.s32 %v2572, %v2747
          %v2749 = vrot.slane %v2301, %v2748
          %v2750 = vsel %vm2577, %v2749, %v2745
          %v2751 = vlaneseq
          %v2752 = vshrl.u32 %v2751, 7
          %v2753 = vsub.s32 %v2579, %v2752
          %v2754 = vrot.slane %v2302, %v2753
          %v2755 = vsel %vm2584, %v2754, %v2750
          %v2756 = vlaneseq
          %v2757 = vshrl.u32 %v2756, 7
          %v2758 = vsub.s32 %v2586, %v2757
          %v2759 = vrot.slane %v2303, %v2758
          %v2760 = vsel %vm2591, %v2759, %v2755
          %v2761 = vlaneseq
          %v2762 = vshrl.u32 %v2761, 7
          %v2763 = vsub.s32 %v2593, %v2762
          %v2764 = vrot.slane %v2304, %v2763
          %v2765 = vsel %vm2598, %v2764, %v2760
          %v2766 = vlaneseq
          %v2767 = vshrl.u32 %v2766, 7
          %v2768 = vsub.s32 %v2600, %v2767
          %v2769 = vrot.slane %v2305, %v2768
          %v2770 = vsel %vm2605, %v2769, %v2765
          %v2771 = vlaneseq
          %v2772 = vshrl.u32 %v2771, 7
          %v2773 = vsub.s32 %v2607, %v2772
          %v2774 = vrot.slane %v2306, %v2773
          %v2775 = vsel %vm2612, %v2774, %v2770
          %v2776 = vlaneseq
          %v2777 = vshrl.u32 %v2776, 7
          %v2778 = vsub.s32 %v2614, %v2777
          %v2779 = vrot.slane %v2307, %v2778
          %v2780 = vsel %vm2619, %v2779, %v2775
          %v2781 = vlaneseq
          %v2782 = vshrl.u32 %v2781, 7
          %v2783 = vsub.s32 %v2621, %v2782
          %v2784 = vrot.slane %v2308, %v2783
          %v2785 = vsel %vm2626, %v2784, %v2780
          %v2786 = vlaneseq
          %v2787 = vshrl.u32 %v2786, 7
          %v2788 = vsub.s32 %v2518, %v2787
          %v2789 = vrot.slane %v2309, %v2788
          %v2790 = vlaneseq
          %v2791 = vshrl.u32 %v2790, 7
          %v2792 = vsub.s32 %v2523, %v2791
          %v2793 = vrot.slane %v2310, %v2792
          %v2794 = vsel %vm2528, %v2793, %v2789
          %v2795 = vlaneseq
          %v2796 = vshrl.u32 %v2795, 7
          %v2797 = vsub.s32 %v2530, %v2796
          %v2798 = vrot.slane %v2311, %v2797
          %v2799 = vsel %vm2535, %v2798, %v2794
          %v2800 = vlaneseq
          %v2801 = vshrl.u32 %v2800, 7
          %v2802 = vsub.s32 %v2537, %v2801
          %v2803 = vrot.slane %v2312, %v2802
          %v2804 = vsel %vm2542, %v2803, %v2799
          %v2805 = vlaneseq
          %v2806 = vshrl.u32 %v2805, 7
          %v2807 = vsub.s32 %v2544, %v2806
          %v2808 = vrot.slane %v2313, %v2807
          %v2809 = vsel %vm2549, %v2808, %v2804
          %v2810 = vlaneseq
          %v2811 = vshrl.u32 %v2810, 7
          %v2812 = vsub.s32 %v2551, %v2811
          %v2813 = vrot.slane %v2314, %v2812
          %v2814 = vsel %vm2556, %v2813, %v2809
          %v2815 = vlaneseq
          %v2816 = vshrl.u32 %v2815, 7
          %v2817 = vsub.s32 %v2558, %v2816
          %v2818 = vrot.slane %v2315, %v2817
          %v2819 = vsel %vm2563, %v2818, %v2814
          %v2820 = vlaneseq
          %v2821 = vshrl.u32 %v2820, 7
          %v2822 = vsub.s32 %v2565, %v2821
          %v2823 = vrot.slane %v2316, %v2822
          %v2824 = vsel %vm2570, %v2823, %v2819
          %v2825 = vlaneseq
          %v2826 = vshrl.u32 %v2825, 7
          %v2827 = vsub.s32 %v2572, %v2826
          %v2828 = vrot.slane %v2317, %v2827
          %v2829 = vsel %vm2577, %v2828, %v2824
          %v2830 = vlaneseq
          %v2831 = vshrl.u32 %v2830, 7
          %v2832 = vsub.s32 %v2579, %v2831
          %v2833 = vrot.slane %v2318, %v2832
          %v2834 = vsel %vm2584, %v2833, %v2829
          %v2835 = vlaneseq
          %v2836 = vshrl.u32 %v2835, 7
          %v2837 = vsub.s32 %v2586, %v2836
          %v2838 = vrot.slane %v2319, %v2837
          %v2839 = vsel %vm2591, %v2838, %v2834
          %v2840 = vlaneseq
          %v2841 = vshrl.u32 %v2840, 7
          %v2842 = vsub.s32 %v2593, %v2841
          %v2843 = vrot.slane %v2320, %v2842
          %v2844 = vsel %vm2598, %v2843, %v2839
          %v2845 = vlaneseq
          %v2846 = vshrl.u32 %v2845, 7
          %v2847 = vsub.s32 %v2600, %v2846
          %v2848 = vrot.slane %v2321, %v2847
          %v2849 = vsel %vm2605, %v2848, %v2844
          %v2850 = vlaneseq
          %v2851 = vshrl.u32 %v2850, 7
          %v2852 = vsub.s32 %v2607, %v2851
          %v2853 = vrot.slane %v2322, %v2852
          %v2854 = vsel %vm2612, %v2853, %v2849
          %v2855 = vlaneseq
          %v2856 = vshrl.u32 %v2855, 7
          %v2857 = vsub.s32 %v2614, %v2856
          %v2858 = vrot.slane %v2323, %v2857
          %v2859 = vsel %vm2619, %v2858, %v2854
          %v2860 = vlaneseq
          %v2861 = vshrl.u32 %v2860, 7
          %v2862 = vsub.s32 %v2621, %v2861
          %v2863 = vrot.slane %v2324, %v2862
          %v2864 = vsel %vm2626, %v2863, %v2859
          %v2865 = vlaneseq
          %v2866 = vshrl.u32 %v2865, 7
          %v2867 = vsub.s32 %v2518, %v2866
          %v2868 = vrot.slane %v2325, %v2867
          %v2869 = vlaneseq
          %v2870 = vshrl.u32 %v2869, 7
          %v2871 = vsub.s32 %v2523, %v2870
          %v2872 = vrot.slane %v2326, %v2871
          %v2873 = vsel %vm2528, %v2872, %v2868
          %v2874 = vlaneseq
          %v2875 = vshrl.u32 %v2874, 7
          %v2876 = vsub.s32 %v2530, %v2875
          %v2877 = vrot.slane %v2327, %v2876
          %v2878 = vsel %vm2535, %v2877, %v2873
          %v2879 = vlaneseq
          %v2880 = vshrl.u32 %v2879, 7
          %v2881 = vsub.s32 %v2537, %v2880
          %v2882 = vrot.slane %v2328, %v2881
          %v2883 = vsel %vm2542, %v2882, %v2878
          %v2884 = vlaneseq
          %v2885 = vshrl.u32 %v2884, 7
          %v2886 = vsub.s32 %v2544, %v2885
          %v2887 = vrot.slane %v2329, %v2886
          %v2888 = vsel %vm2549, %v2887, %v2883
          %v2889 = vlaneseq
          %v2890 = vshrl.u32 %v2889, 7
          %v2891 = vsub.s32 %v2551, %v2890
          %v2892 = vrot.slane %v2330, %v2891
          %v2893 = vsel %vm2556, %v2892, %v2888
          %v2894 = vlaneseq
          %v2895 = vshrl.u32 %v2894, 7
          %v2896 = vsub.s32 %v2558, %v2895
          %v2897 = vrot.slane %v2331, %v2896
          %v2898 = vsel %vm2563, %v2897, %v2893
          %v2899 = vlaneseq
          %v2900 = vshrl.u32 %v2899, 7
          %v2901 = vsub.s32 %v2565, %v2900
          %v2902 = vrot.slane %v2332, %v2901
          %v2903 = vsel %vm2570, %v2902, %v2898
          %v2904 = vlaneseq
          %v2905 = vshrl.u32 %v2904, 7
          %v2906 = vsub.s32 %v2572, %v2905
          %v2907 = vrot.slane %v2333, %v2906
          %v2908 = vsel %vm2577, %v2907, %v2903
          %v2909 = vlaneseq
          %v2910 = vshrl.u32 %v2909, 7
          %v2911 = vsub.s32 %v2579, %v2910
          %v2912 = vrot.slane %v2334, %v2911
          %v2913 = vsel %vm2584, %v2912, %v2908
          %v2914 = vlaneseq
          %v2915 = vshrl.u32 %v2914, 7
          %v2916 = vsub.s32 %v2586, %v2915
          %v2917 = vrot.slane %v2335, %v2916
          %v2918 = vsel %vm2591, %v2917, %v2913
          %v2919 = vlaneseq
          %v2920 = vshrl.u32 %v2919, 7
          %v2921 = vsub.s32 %v2593, %v2920
          %v2922 = vrot.slane %v2336, %v2921
          %v2923 = vsel %vm2598, %v2922, %v2918
          %v2924 = vlaneseq
          %v2925 = vshrl.u32 %v2924, 7
          %v2926 = vsub.s32 %v2600, %v2925
          %v2927 = vrot.slane %v2337, %v2926
          %v2928 = vsel %vm2605, %v2927, %v2923
          %v2929 = vlaneseq
          %v2930 = vshrl.u32 %v2929, 7
          %v2931 = vsub.s32 %v2607, %v2930
          %v2932 = vrot.slane %v2338, %v2931
          %v2933 = vsel %vm2612, %v2932, %v2928
          %v2934 = vlaneseq
          %v2935 = vshrl.u32 %v2934, 7
          %v2936 = vsub.s32 %v2614, %v2935
          %v2937 = vrot.slane %v2339, %v2936
          %v2938 = vsel %vm2619, %v2937, %v2933
          %v2939 = vlaneseq
          %v2940 = vshrl.u32 %v2939, 7
          %v2941 = vsub.s32 %v2621, %v2940
          %v2942 = vrot.slane %v2340, %v2941
          %v2943 = vsel %vm2626, %v2942, %v2938
          %v2944 = vlaneseq
          %v2945 = vshrl.u32 %v2944, 7
          %v2946 = vsub.s32 %v2518, %v2945
          %v2947 = vrot.slane %v2341, %v2946
          %v2948 = vlaneseq
          %v2949 = vshrl.u32 %v2948, 7
          %v2950 = vsub.s32 %v2523, %v2949
          %v2951 = vrot.slane %v2342, %v2950
          %v2952 = vsel %vm2528, %v2951, %v2947
          %v2953 = vlaneseq
          %v2954 = vshrl.u32 %v2953, 7
          %v2955 = vsub.s32 %v2530, %v2954
          %v2956 = vrot.slane %v2343, %v2955
          %v2957 = vsel %vm2535, %v2956, %v2952
          %v2958 = vlaneseq
          %v2959 = vshrl.u32 %v2958, 7
          %v2960 = vsub.s32 %v2537, %v2959
          %v2961 = vrot.slane %v2344, %v2960
          %v2962 = vsel %vm2542, %v2961, %v2957
          %v2963 = vlaneseq
          %v2964 = vshrl.u32 %v2963, 7
          %v2965 = vsub.s32 %v2544, %v2964
          %v2966 = vrot.slane %v2345, %v2965
          %v2967 = vsel %vm2549, %v2966, %v2962
          %v2968 = vlaneseq
          %v2969 = vshrl.u32 %v2968, 7
          %v2970 = vsub.s32 %v2551, %v2969
          %v2971 = vrot.slane %v2346, %v2970
          %v2972 = vsel %vm2556, %v2971, %v2967
          %v2973 = vlaneseq
          %v2974 = vshrl.u32 %v2973, 7
          %v2975 = vsub.s32 %v2558, %v2974
          %v2976 = vrot.slane %v2347, %v2975
          %v2977 = vsel %vm2563, %v2976, %v2972
          %v2978 = vlaneseq
          %v2979 = vshrl.u32 %v2978, 7
          %v2980 = vsub.s32 %v2565, %v2979
          %v2981 = vrot.slane %v2348, %v2980
          %v2982 = vsel %vm2570, %v2981, %v2977
          %v2983 = vlaneseq
          %v2984 = vshrl.u32 %v2983, 7
          %v2985 = vsub.s32 %v2572, %v2984
          %v2986 = vrot.slane %v2349, %v2985
          %v2987 = vsel %vm2577, %v2986, %v2982
          %v2988 = vlaneseq
          %v2989 = vshrl.u32 %v2988, 7
          %v2990 = vsub.s32 %v2579, %v2989
          %v2991 = vrot.slane %v2350, %v2990
          %v2992 = vsel %vm2584, %v2991, %v2987
          %v2993 = vlaneseq
          %v2994 = vshrl.u32 %v2993, 7
          %v2995 = vsub.s32 %v2586, %v2994
          %v2996 = vrot.slane %v2351, %v2995
          %v2997 = vsel %vm2591, %v2996, %v2992
          %v2998 = vlaneseq
          %v2999 = vshrl.u32 %v2998, 7
          %v3000 = vsub.s32 %v2593, %v2999
          %v3001 = vrot.slane %v2352, %v3000
          %v3002 = vsel %vm2598, %v3001, %v2997
          %v3003 = vlaneseq
          %v3004 = vshrl.u32 %v3003, 7
          %v3005 = vsub.s32 %v2600, %v3004
          %v3006 = vrot.slane %v2353, %v3005
          %v3007 = vsel %vm2605, %v3006, %v3002
          %v3008 = vlaneseq
          %v3009 = vshrl.u32 %v3008, 7
          %v3010 = vsub.s32 %v2607, %v3009
          %v3011 = vrot.slane %v2354, %v3010
          %v3012 = vsel %vm2612, %v3011, %v3007
          %v3013 = vlaneseq
          %v3014 = vshrl.u32 %v3013, 7
          %v3015 = vsub.s32 %v2614, %v3014
          %v3016 = vrot.slane %v2355, %v3015
          %v3017 = vsel %vm2619, %v3016, %v3012
          %v3018 = vlaneseq
          %v3019 = vshrl.u32 %v3018, 7
          %v3020 = vsub.s32 %v2621, %v3019
          %v3021 = vrot.slane %v2356, %v3020
          %v3022 = vsel %vm2626, %v3021, %v3017
          %v3023 = vlaneseq
          %v3024 = vshrl.u32 %v3023, 7
          %v3025 = vsub.s32 %v2518, %v3024
          %v3026 = vrot.slane %v2357, %v3025
          %v3027 = vlaneseq
          %v3028 = vshrl.u32 %v3027, 7
          %v3029 = vsub.s32 %v2523, %v3028
          %v3030 = vrot.slane %v2358, %v3029
          %v3031 = vsel %vm2528, %v3030, %v3026
          %v3032 = vlaneseq
          %v3033 = vshrl.u32 %v3032, 7
          %v3034 = vsub.s32 %v2530, %v3033
          %v3035 = vrot.slane %v2359, %v3034
          %v3036 = vsel %vm2535, %v3035, %v3031
          %v3037 = vlaneseq
          %v3038 = vshrl.u32 %v3037, 7
          %v3039 = vsub.s32 %v2537, %v3038
          %v3040 = vrot.slane %v2360, %v3039
          %v3041 = vsel %vm2542, %v3040, %v3036
          %v3042 = vlaneseq
          %v3043 = vshrl.u32 %v3042, 7
          %v3044 = vsub.s32 %v2544, %v3043
          %v3045 = vrot.slane %v2361, %v3044
          %v3046 = vsel %vm2549, %v3045, %v3041
          %v3047 = vlaneseq
          %v3048 = vshrl.u32 %v3047, 7
          %v3049 = vsub.s32 %v2551, %v3048
          %v3050 = vrot.slane %v2362, %v3049
          %v3051 = vsel %vm2556, %v3050, %v3046
          %v3052 = vlaneseq
          %v3053 = vshrl.u32 %v3052, 7
          %v3054 = vsub.s32 %v2558, %v3053
          %v3055 = vrot.slane %v2363, %v3054
          %v3056 = vsel %vm2563, %v3055, %v3051
          %v3057 = vlaneseq
          %v3058 = vshrl.u32 %v3057, 7
          %v3059 = vsub.s32 %v2565, %v3058
          %v3060 = vrot.slane %v2364, %v3059
          %v3061 = vsel %vm2570, %v3060, %v3056
          %v3062 = vlaneseq
          %v3063 = vshrl.u32 %v3062, 7
          %v3064 = vsub.s32 %v2572, %v3063
          %v3065 = vrot.slane %v2365, %v3064
          %v3066 = vsel %vm2577, %v3065, %v3061
          %v3067 = vlaneseq
          %v3068 = vshrl.u32 %v3067, 7
          %v3069 = vsub.s32 %v2579, %v3068
          %v3070 = vrot.slane %v2366, %v3069
          %v3071 = vsel %vm2584, %v3070, %v3066
          %v3072 = vlaneseq
          %v3073 = vshrl.u32 %v3072, 7
          %v3074 = vsub.s32 %v2586, %v3073
          %v3075 = vrot.slane %v2367, %v3074
          %v3076 = vsel %vm2591, %v3075, %v3071
          %v3077 = vlaneseq
          %v3078 = vshrl.u32 %v3077, 7
          %v3079 = vsub.s32 %v2593, %v3078
          %v3080 = vrot.slane %v2368, %v3079
          %v3081 = vsel %vm2598, %v3080, %v3076
          %v3082 = vlaneseq
          %v3083 = vshrl.u32 %v3082, 7
          %v3084 = vsub.s32 %v2600, %v3083
          %v3085 = vrot.slane %v2369, %v3084
          %v3086 = vsel %vm2605, %v3085, %v3081
          %v3087 = vlaneseq
          %v3088 = vshrl.u32 %v3087, 7
          %v3089 = vsub.s32 %v2607, %v3088
          %v3090 = vrot.slane %v2370, %v3089
          %v3091 = vsel %vm2612, %v3090, %v3086
          %v3092 = vlaneseq
          %v3093 = vshrl.u32 %v3092, 7
          %v3094 = vsub.s32 %v2614, %v3093
          %v3095 = vrot.slane %v2371, %v3094
          %v3096 = vsel %vm2619, %v3095, %v3091
          %v3097 = vlaneseq
          %v3098 = vshrl.u32 %v3097, 7
          %v3099 = vsub.s32 %v2621, %v3098
          %v3100 = vrot.slane %v2372, %v3099
          %v3101 = vsel %vm2626, %v3100, %v3096
          %v3102 = vlaneseq
          %v3103 = vshrl.u32 %v3102, 7
          %v3104 = vsub.s32 %v2518, %v3103
          %v3105 = vrot.slane %v2373, %v3104
          %v3106 = vlaneseq
          %v3107 = vshrl.u32 %v3106, 7
          %v3108 = vsub.s32 %v2523, %v3107
          %v3109 = vrot.slane %v2374, %v3108
          %v3110 = vsel %vm2528, %v3109, %v3105
          %v3111 = vlaneseq
          %v3112 = vshrl.u32 %v3111, 7
          %v3113 = vsub.s32 %v2530, %v3112
          %v3114 = vrot.slane %v2375, %v3113
          %v3115 = vsel %vm2535, %v3114, %v3110
          %v3116 = vlaneseq
          %v3117 = vshrl.u32 %v3116, 7
          %v3118 = vsub.s32 %v2537, %v3117
          %v3119 = vrot.slane %v2376, %v3118
          %v3120 = vsel %vm2542, %v3119, %v3115
          %v3121 = vlaneseq
          %v3122 = vshrl.u32 %v3121, 7
          %v3123 = vsub.s32 %v2544, %v3122
          %v3124 = vrot.slane %v2377, %v3123
          %v3125 = vsel %vm2549, %v3124, %v3120
          %v3126 = vlaneseq
          %v3127 = vshrl.u32 %v3126, 7
          %v3128 = vsub.s32 %v2551, %v3127
          %v3129 = vrot.slane %v2378, %v3128
          %v3130 = vsel %vm2556, %v3129, %v3125
          %v3131 = vlaneseq
          %v3132 = vshrl.u32 %v3131, 7
          %v3133 = vsub.s32 %v2558, %v3132
          %v3134 = vrot.slane %v2379, %v3133
          %v3135 = vsel %vm2563, %v3134, %v3130
          %v3136 = vlaneseq
          %v3137 = vshrl.u32 %v3136, 7
          %v3138 = vsub.s32 %v2565, %v3137
          %v3139 = vrot.slane %v2380, %v3138
          %v3140 = vsel %vm2570, %v3139, %v3135
          %v3141 = vlaneseq
          %v3142 = vshrl.u32 %v3141, 7
          %v3143 = vsub.s32 %v2572, %v3142
          %v3144 = vrot.slane %v2381, %v3143
          %v3145 = vsel %vm2577, %v3144, %v3140
          %v3146 = vlaneseq
          %v3147 = vshrl.u32 %v3146, 7
          %v3148 = vsub.s32 %v2579, %v3147
          %v3149 = vrot.slane %v2382, %v3148
          %v3150 = vsel %vm2584, %v3149, %v3145
          %v3151 = vlaneseq
          %v3152 = vshrl.u32 %v3151, 7
          %v3153 = vsub.s32 %v2586, %v3152
          %v3154 = vrot.slane %v2383, %v3153
          %v3155 = vsel %vm2591, %v3154, %v3150
          %v3156 = vlaneseq
          %v3157 = vshrl.u32 %v3156, 7
          %v3158 = vsub.s32 %v2593, %v3157
          %v3159 = vrot.slane %v2384, %v3158
          %v3160 = vsel %vm2598, %v3159, %v3155
          %v3161 = vlaneseq
          %v3162 = vshrl.u32 %v3161, 7
          %v3163 = vsub.s32 %v2600, %v3162
          %v3164 = vrot.slane %v2385, %v3163
          %v3165 = vsel %vm2605, %v3164, %v3160
          %v3166 = vlaneseq
          %v3167 = vshrl.u32 %v3166, 7
          %v3168 = vsub.s32 %v2607, %v3167
          %v3169 = vrot.slane %v2386, %v3168
          %v3170 = vsel %vm2612, %v3169, %v3165
          %v3171 = vlaneseq
          %v3172 = vshrl.u32 %v3171, 7
          %v3173 = vsub.s32 %v2614, %v3172
          %v3174 = vrot.slane %v2387, %v3173
          %v3175 = vsel %vm2619, %v3174, %v3170
          %v3176 = vlaneseq
          %v3177 = vshrl.u32 %v3176, 7
          %v3178 = vsub.s32 %v2621, %v3177
          %v3179 = vrot.slane %v2388, %v3178
          %v3180 = vsel %vm2626, %v3179, %v3175
          %vm3181 = vcmask 1041409
          %v3182 = vsel %vm3181, %v2706, %v2627
          %vm3183 = vcmask 1042434
          %v3184 = vsel %vm3183, %v2785, %v3182
          %vm3185 = vcmask 1043459
          %v3186 = vsel %vm3185, %v2864, %v3184
          %vm3187 = vcmask 1044484
          %v3188 = vsel %vm3187, %v2943, %v3186
          %vm3189 = vcmask 1045509
          %v3190 = vsel %vm3189, %v3022, %v3188
          %vm3191 = vcmask 1046534
          %v3192 = vsel %vm3191, %v3101, %v3190
          %vm3193 = vcmask 1047559
          %v3194 = vsel %vm3193, %v3180, %v3192
          %3196 = vst [vmem:[#allocation4] sm:$0xff] %v3194
        $region48: #{tpu_custom_call.1} parent=39 // pred_fallthru
          _
        // Predicated region
        $region49: #{tpu_custom_call.1} parent=39 // pred_check
          %p3197 = pneg %p146
        $region50: #{tpu_custom_call.1} parent=39 // pred_check_branch
          %3199 = sbr.rel (%p3197) target = $region52
        $region51: #{tpu_custom_call.1} parent=39 // pred_region
          %s3201 = ssub.s32 128, 128
          %3202 = vsyncadd [#allocation5], %s3201
          %s3204 = sshll.u32 [#allocation4], 4
          %s3205 = int_to_ptr.vmem [resolvable:$true] %s3204
          %3207 = dma.vmem_to_hbm [thread:$0]  %s3205, 128, %s5, [#allocation5]
        $region52: #{tpu_custom_call.1} parent=39 // pred_fallthru
          _
        // Predicated region
        $region53: #{tpu_custom_call.1} parent=39 // pred_check
          %p3208 = pneg %p146
        $region54: #{tpu_custom_call.1} parent=39 // pred_check_branch
          %3210 = sbr.rel (%p3208) target = $region56
        $region55: #{tpu_custom_call.1} parent=39 // pred_region
          %3211 = dma.done [#allocation5], 128
        $region56: #{tpu_custom_call.1} parent=39 // pred_fallthru
          _
      $region40: #{tpu_custom_call.1} parent=5 // pred_fallthru
        _
      %p3212 = scmp.le.s32.totalorder 2, %s13
      // Predicated region
      $region57: #{tpu_custom_call.1} parent=5 // pred_check
        %p3213 = pneg %p3212
      $region58: #{tpu_custom_call.1} parent=5 // pred_check_branch
        %3215 = sbr.rel (%p3213) target = $region60
      $region59: #{tpu_custom_call.1} parent=5 // pred_region
        %s3216 = ssub.s32 %s13, 2
      $region60: #{tpu_custom_call.1} parent=5 // pred_fallthru
        _
    $region6: #{tpu_custom_call.1} parent=1 // loop_footer
      %s17 = sadd.s32 1, %s13
    $region7: #{tpu_custom_call.1} parent=1 // loop_footer_branch
      %12 = sbr.rel target = $region3
    $region8: #{tpu_custom_call.1} parent=1 // loop_exit
      _
    %3217 = vsyncpa [#allocation5], 1
    %s3218 = scalar_lea.sflag [#allocation5], 1
    %3219 = vsyncpa %s3218, 1

</llo_original>
